<compile_context>
chip_gen: v7x
topology: tpu7x:2x2x1
jax: 0.10.0
libtpu: 0.0.40
codegen_flags: <defaults>
</compile_context>

<pallas_src>
import math

import jax
import jax.numpy as jnp
from jax.experimental import pallas as pl
from jax.experimental.pallas import tpu as pltpu

N_HEROES = 10
_HIGHEST = jax.lax.Precision.HIGHEST


def _round_up(x, m):
    return ((x + m - 1) // m) * m


# ---------------------------------------------------------------------------
# Kernel: whole Gcnn as a chain of lane-dense matmuls on a (TB, lanes) slab
# ---------------------------------------------------------------------------
def _make_gcnn_kernel(num_layers, apply_final_relu, compute_dtype):
    def kernel(*refs):
        # refs = [x, P_0..P_{L-1}, q_0..q_{L-1}, K_last, c_last, out]
        x_ref = refs[0]
        p_refs = refs[1:1 + num_layers]
        q_refs = refs[1 + num_layers:1 + 2 * num_layers]
        k_ref = refs[1 + 2 * num_layers]
        c_ref = refs[2 + 2 * num_layers]
        o_ref = refs[3 + 2 * num_layers]

        act = x_ref[...]                                    # (TB, N*Din)
        for l in range(num_layers):                         # static unroll (L small)
            h = jnp.dot(act, p_refs[l][...],
                        preferred_element_type=jnp.float32)
            h = jnp.maximum(h + q_refs[l][...], 0.0)        # bias + in-block ReLU
            act = h.astype(compute_dtype)
        # Last block's adjacency matmul + 1x1 conv aggregation (folded into K_last).
        out = jnp.dot(act, k_ref[...], preferred_element_type=jnp.float32)
        out = out + c_ref[...]
        if apply_final_relu:                                # trailing Gcnn ReLU
            out = jnp.maximum(out, 0.0)
        o_ref[...] = out.astype(o_ref.dtype)                # (TB, N*Dout) lane-dense

    return kernel


# ---------------------------------------------------------------------------
# Wrapper-side constant folding into slab matrices
# ---------------------------------------------------------------------------
def _build_slab_params(params, adj_norm):
    """Fold Linears + adjacencies + 1x1 conv into dense slab matrices.

    Slab lane layout: hero-major, feature-minor (lane = n*D + d).
    Forward equals:
        act = x.reshape(B, N*Din)
        for P, q in zip(Ps, qs): act = relu(act @ P + q)
        out = act @ K_last + c_last        # (B, N*Dout_last)
    """
    num_adj, n, _ = adj_norm.shape
    eye_n = jnp.eye(n, dtype=jnp.float32)
    w_blks, b_blks, k_mats, conv_biases = [], [], [], []
    for wt, b, cw, cb in params:
        din, dout = wt.shape[1], wt.shape[2]
        # (A, Din, Dout) -> (Din, A*Dout); hidden lane layout = a*Dout + d.
        w_cat = jnp.transpose(wt, (1, 0, 2)).reshape(din, num_adj * dout)
        b_cat = b.reshape(num_adj * dout)
        w_blks.append(jnp.kron(eye_n, w_cat))               # (N*Din, N*A*Dout)
        b_blks.append(jnp.tile(b_cat, n)[None, :])          # (1, N*A*Dout)
        # K[(m,a,d),(n,d')] = conv_w[a] * adj_norm[a,n,m] * delta(d,d')
        adj_s = adj_norm * cw[:, None, None]                # conv weight folded in
        eye_d = jnp.eye(dout, dtype=jnp.float32)
        k = (jnp.transpose(adj_s, (2, 0, 1))[:, :, None, :, None]
             * eye_d[None, None, :, None, :]).reshape(n * num_adj * dout, n * dout)
        k_mats.append(k)
        conv_biases.append(jnp.asarray(cb, jnp.float32))

    num_layers = len(params)
    ps = [w_blks[0]]
    qs = [b_blks[0]]
    for l in range(1, num_layers):
        # No nonlinearity between block l-1's conv_agg output and block l's Linear:
        # fuse adjacency+conv of block l-1 into block l's Linear matrix / bias.
        ps.append(jnp.matmul(k_mats[l - 1], w_blks[l], precision=_HIGHEST))
        col_sum = jnp.sum(w_blks[l], axis=0, keepdims=True)
        qs.append(conv_biases[l - 1] * col_sum + b_blks[l])
    dout_last = params[-1][0].shape[2]
    c_last = jnp.full((1, n * dout_last), conv_biases[-1], jnp.float32)
    return ps, qs, k_mats[-1], c_last


def gcnn_forward_pallas(x, adj_norm, params, *, activation=True,
                        batch_tile=256, use_bf16=False):
    """Full Gcnn forward in a single fused pallas_call, grid over batch tiles."""
    batch, n, din = x.shape
    dout_last = params[-1][0].shape[2]
    ps, qs, k_last, c_last = _build_slab_params(params, adj_norm)

    # Batch tile: multiple of 8 sublanes. Size per generation for VMEM headroom
    # (v7x: 64 MiB physical / 32 MiB default scoped vs 128 MiB on v5e/v6e).
    tb = _round_up(max(1, min(batch_tile, batch)), 8)
    padded_b = _round_up(batch, tb)
    x_slab = x.reshape(batch, n * din)                      # lane-dense input slab
    if padded_b != batch:
        x_slab = jnp.pad(x_slab, ((0, padded_b - batch), (0, 0)))

    compute_dtype = jnp.bfloat16 if use_bf16 else jnp.float32
    x_slab = x_slab.astype(compute_dtype)
    ps = [p.astype(compute_dtype) for p in ps]
    k_last = k_last.astype(compute_dtype)
    # biases (qs, c_last) stay f32; accumulation is always f32.

    win, wout = n * din, n * dout_last
    num_layers = len(params)
    grid = (padded_b // tb,)

    def _const_spec(arr):                                   # grid-invariant inputs
        return pl.BlockSpec(arr.shape, lambda i: (0, 0))

    in_specs = ([pl.BlockSpec((tb, win), lambda i: (i, 0))]
                + [_const_spec(p) for p in ps]
                + [_const_spec(q) for q in qs]
                + [_const_spec(k_last), _const_spec(c_last)])

    out = pl.pallas_call(
        _make_gcnn_kernel(num_layers, apply_final_relu=activation,
                          compute_dtype=compute_dtype),
        out_shape=jax.ShapeDtypeStruct((padded_b, wout), jnp.float32),
        grid=grid,
        in_specs=in_specs,
        out_specs=pl.BlockSpec((tb, wout), lambda i: (i, 0)),
        compiler_params=pltpu.CompilerParams(
            dimension_semantics=("parallel",)),
    )(x_slab, *ps, *qs, k_last, c_last)

    return out[:batch].reshape(batch, n, dout_last)


# ---------------------------------------------------------------------------
# Pure-JAX reference (mirrors the PyTorch module), param init, demo
# ---------------------------------------------------------------------------
def gcnn_reference(x, adj_norm, params, activation=True):
    num_layers = len(params)
    for l, (wt, b, cw, cb) in enumerate(params):
        acc = None
        for a in range(adj_norm.shape[0]):
            h = jnp.einsum('bnd,de->bne', x, wt[a], precision=_HIGHEST) + b[a]
            h = jnp.maximum(h, 0.0)
            m = jnp.einsum('nm,bme->bne', adj_norm[a], h, precision=_HIGHEST)
            acc = cw[a] * m if acc is None else acc + cw[a] * m
        x = acc + cb
        if activation and l == num_layers - 1:
            x = jnp.maximum(x, 0.0)
    return x


def init_gcnn_params(key, input_dim, layers, num_adj):
    dims_in = [input_dim] + list(layers[:-1])
    dims_out = list(layers)
    params = []
    for din, dout in zip(dims_in, dims_out):
        key, k1, k2, k3, k4 = jax.random.split(key, 5)
        bound = 1.0 / math.sqrt(din)
        # nn.Linear weight is (out, in); stored transposed as (A, in, out).
        wt = jax.random.uniform(k1, (num_adj, din, dout), jnp.float32, -bound, bound)
        b = jax.random.uniform(k2, (num_adj, dout), jnp.float32, -bound, bound)
        cbound = 1.0 / math.sqrt(num_adj)       # Conv2d(A, 1, 1): fan_in = A
        cw = jax.random.uniform(k3, (num_adj,), jnp.float32, -cbound, cbound)
        cb = jax.random.uniform(k4, (), jnp.float32, -cbound, cbound)
        params.append((wt, b, cw, cb))
    return params


if __name__ == "__main__":
    key = jax.random.PRNGKey(0)
    batch = 64
    input_dim = 32
    layers = (32, 16)        # GcnnConfig.layers
    num_adj = 2              # number of adjacency matrices
    activation = True        # GcnnConfig.activation

    key, kx, ka, kp = jax.random.split(key, 4)
    x = jax.random.normal(kx, (batch, N_HEROES, input_dim), dtype=jnp.float32)
    adj_raw = jax.random.uniform(ka, (num_adj, N_HEROES, N_HEROES), dtype=jnp.float32)
    # torch.nn.functional.normalize(adj, p=1, dim=1): row-wise L1 normalization.
    adj_norm = adj_raw / jnp.maximum(
        jnp.sum(jnp.abs(adj_raw), axis=2, keepdims=True), 1e-12)

    params = init_gcnn_params(kp, input_dim, layers, num_adj)

    # f32 path (all generations); batch_tile=32 -> grid of 2 parallel tiles.
    out = gcnn_forward_pallas(x, adj_norm, params, activation=activation,
                              batch_tile=32)
    out = jax.block_until_ready(out)

    ref = gcnn_reference(x, adj_norm, params, activation=activation)
    assert out.shape == (batch, N_HEROES, layers[-1])
    assert jnp.allclose(out, ref, atol=2e-3, rtol=2e-3), float(
        jnp.max(jnp.abs(out - ref)))

    # bf16 inputs/weights (v6e/v7x HBM-byte win); accumulation stays f32.
    out_bf16 = gcnn_forward_pallas(x, adj_norm, params, activation=activation,
                                   batch_tile=32, use_bf16=True)
    out_bf16 = jax.block_until_ready(out_bf16)
    assert float(jnp.max(jnp.abs(out_bf16 - ref))) < 5e-2

    print("KERNEL_OK")
</pallas_src>

<mosaic_0001>
module attributes {stable_mosaic.version = 11 : i64} {
  func.func @kernel(%arg0: i32, %arg1: memref<32x320xf32, #tpu.memory_space<vmem>>, %arg2: memref<320x640xf32, #tpu.memory_space<vmem>>, %arg3: memref<640x320xf32, #tpu.memory_space<vmem>>, %arg4: memref<1x640xf32, #tpu.memory_space<vmem>>, %arg5: memref<1x320xf32, #tpu.memory_space<vmem>>, %arg6: memref<320x160xf32, #tpu.memory_space<vmem>>, %arg7: memref<1x160xf32, #tpu.memory_space<vmem>>, %arg8: memref<32x160xf32, #tpu.memory_space<vmem>>) attributes {dimension_semantics = [#tpu.dimension_semantics<parallel>], iteration_bounds = array<i64: 2>, scalar_prefetch = 0 : i64, scratch_operands = 0 : i64, tpu.core_type = #tpu.core_type<tc>, window_params = [{transform_indices = @transform_0, window_bounds = array<i64: 32, 320>}, {pipeline_mode = #tpu.pipeline_mode<synchronous>, transform_indices = @transform_1, window_bounds = array<i64: 320, 640>}, {pipeline_mode = #tpu.pipeline_mode<synchronous>, transform_indices = @transform_2, window_bounds = array<i64: 640, 320>}, {pipeline_mode = #tpu.pipeline_mode<synchronous>, transform_indices = @transform_3, window_bounds = array<i64: 1, 640>}, {pipeline_mode = #tpu.pipeline_mode<synchronous>, transform_indices = @transform_4, window_bounds = array<i64: 1, 320>}, {pipeline_mode = #tpu.pipeline_mode<synchronous>, transform_indices = @transform_5, window_bounds = array<i64: 320, 160>}, {pipeline_mode = #tpu.pipeline_mode<synchronous>, transform_indices = @transform_6, window_bounds = array<i64: 1, 160>}, {transform_indices = @transform_7, window_bounds = array<i64: 32, 160>}]} {
    %c0 = arith.constant 0 : index
    %c0_0 = arith.constant 0 : index
    %0 = vector.load %arg1[%c0, %c0_0] : memref<32x320xf32, #tpu.memory_space<vmem>>, vector<32x320xf32>
    %c0_1 = arith.constant 0 : index
    %c0_2 = arith.constant 0 : index
    %1 = vector.load %arg2[%c0_1, %c0_2] : memref<320x640xf32, #tpu.memory_space<vmem>>, vector<320x640xf32>
    %cst = arith.constant dense<0.000000e+00> : vector<32x640xf32>
    %2 = tpu.matmul %0, %1, %cst {dimension_numbers = #tpu.dot_dimension_numbers<[1], [0], [0], [1], [0, 0, 1, 1], [], []>} : vector<32x320xf32>, vector<320x640xf32>, vector<32x640xf32> -> vector<32x640xf32>
    %c0_3 = arith.constant 0 : index
    %c0_4 = arith.constant 0 : index
    %3 = vector.load %arg4[%c0_3, %c0_4] : memref<1x640xf32, #tpu.memory_space<vmem>>, vector<1x640xf32>
    %4 = vector.broadcast %3 : vector<1x640xf32> to vector<32x640xf32>
    %5 = arith.addf %2, %4 : vector<32x640xf32>
    %cst_5 = arith.constant 0.000000e+00 : f32
    %6 = vector.broadcast %cst_5 : f32 to vector<32x640xf32>
    %7 = arith.maximumf %5, %6 : vector<32x640xf32>
    %c0_6 = arith.constant 0 : index
    %c0_7 = arith.constant 0 : index
    %8 = vector.load %arg3[%c0_6, %c0_7] : memref<640x320xf32, #tpu.memory_space<vmem>>, vector<640x320xf32>
    %cst_8 = arith.constant dense<0.000000e+00> : vector<32x320xf32>
    %9 = tpu.matmul %7, %8, %cst_8 {dimension_numbers = #tpu.dot_dimension_numbers<[1], [0], [0], [1], [0, 0, 1, 1], [], []>} : vector<32x640xf32>, vector<640x320xf32>, vector<32x320xf32> -> vector<32x320xf32>
    %c0_9 = arith.constant 0 : index
    %c0_10 = arith.constant 0 : index
    %10 = vector.load %arg5[%c0_9, %c0_10] : memref<1x320xf32, #tpu.memory_space<vmem>>, vector<1x320xf32>
    %11 = vector.broadcast %10 : vector<1x320xf32> to vector<32x320xf32>
    %12 = arith.addf %9, %11 : vector<32x320xf32>
    %cst_11 = arith.constant 0.000000e+00 : f32
    %13 = vector.broadcast %cst_11 : f32 to vector<32x320xf32>
    %14 = arith.maximumf %12, %13 : vector<32x320xf32>
    %c0_12 = arith.constant 0 : index
    %c0_13 = arith.constant 0 : index
    %15 = vector.load %arg6[%c0_12, %c0_13] : memref<320x160xf32, #tpu.memory_space<vmem>>, vector<320x160xf32>
    %cst_14 = arith.constant dense<0.000000e+00> : vector<32x160xf32>
    %16 = tpu.matmul %14, %15, %cst_14 {dimension_numbers = #tpu.dot_dimension_numbers<[1], [0], [0], [1], [0, 0, 1, 1], [], []>} : vector<32x320xf32>, vector<320x160xf32>, vector<32x160xf32> -> vector<32x160xf32>
    %c0_15 = arith.constant 0 : index
    %c0_16 = arith.constant 0 : index
    %17 = vector.load %arg7[%c0_15, %c0_16] : memref<1x160xf32, #tpu.memory_space<vmem>>, vector<1x160xf32>
    %18 = vector.broadcast %17 : vector<1x160xf32> to vector<32x160xf32>
    %19 = arith.addf %16, %18 : vector<32x160xf32>
    %cst_17 = arith.constant 0.000000e+00 : f32
    %20 = vector.broadcast %cst_17 : f32 to vector<32x160xf32>
    %21 = arith.maximumf %19, %20 : vector<32x160xf32>
    %c0_18 = arith.constant 0 : index
    %c0_19 = arith.constant 0 : index
    %22 = vector.load %arg8[%c0_18, %c0_19] : memref<32x160xf32, #tpu.memory_space<vmem>>, vector<32x160xf32>
    tpu.vector_store %arg8[%c0_18, %c0_19], %21 {strides = array<i32>} : memref<32x160xf32, #tpu.memory_space<vmem>>, vector<32x160xf32>,
    return
  }
  func.func @transform_0(%arg0: i32) -> (i32, i32) {
    %c0_i32 = arith.constant 0 : i32
    %c0_i32_0 = arith.constant 0 : i32
    return %arg0, %c0_i32 : i32, i32
  }
  func.func @transform_1(%arg0: i32) -> (i32, i32) {
    %c0_i32 = arith.constant 0 : i32
    %c0_i32_0 = arith.constant 0 : i32
    %c0_i32_1 = arith.constant 0 : i32
    return %c0_i32, %c0_i32_0 : i32, i32
  }
  func.func @transform_2(%arg0: i32) -> (i32, i32) {
    %c0_i32 = arith.constant 0 : i32
    %c0_i32_0 = arith.constant 0 : i32
    %c0_i32_1 = arith.constant 0 : i32
    return %c0_i32, %c0_i32_0 : i32, i32
  }
  func.func @transform_3(%arg0: i32) -> (i32, i32) {
    %c0_i32 = arith.constant 0 : i32
    %c0_i32_0 = arith.constant 0 : i32
    %c0_i32_1 = arith.constant 0 : i32
    return %c0_i32, %c0_i32_0 : i32, i32
  }
  func.func @transform_4(%arg0: i32) -> (i32, i32) {
    %c0_i32 = arith.constant 0 : i32
    %c0_i32_0 = arith.constant 0 : i32
    %c0_i32_1 = arith.constant 0 : i32
    return %c0_i32, %c0_i32_0 : i32, i32
  }
  func.func @transform_5(%arg0: i32) -> (i32, i32) {
    %c0_i32 = arith.constant 0 : i32
    %c0_i32_0 = arith.constant 0 : i32
    %c0_i32_1 = arith.constant 0 : i32
    return %c0_i32, %c0_i32_0 : i32, i32
  }
  func.func @transform_6(%arg0: i32) -> (i32, i32) {
    %c0_i32 = arith.constant 0 : i32
    %c0_i32_0 = arith.constant 0 : i32
    %c0_i32_1 = arith.constant 0 : i32
    return %c0_i32, %c0_i32_0 : i32, i32
  }
  func.func @transform_7(%arg0: i32) -> (i32, i32) {
    %c0_i32 = arith.constant 0 : i32
    %c0_i32_0 = arith.constant 0 : i32
    return %arg0, %c0_i32 : i32, i32
  }
}

</mosaic_0001>

<llo_original>
// kernel: tpu_custom_call.1
$region0: #{tpu_custom_call.1}
  #allocation0 [shape = 'u32[]', space=smem, size = 0x4, offset = 0x4, fixed_abs, tag = 'smem constant byte address 0x4 - core index']
  #allocation1 [shape = 'u32[144,128]{1,0:T(1,128)}', space=vmem, size = 0x12000, scoped, tag = 'internal scratch']
  %s0 = inlined_call_operand.vmem [shape: f32[64,320], index: 0, kind: input, shape index: {}]
  %s1 = inlined_call_operand.vmem [shape: f32[320,640], index: 1, kind: input, shape index: {}]
  %s2 = inlined_call_operand.vmem [shape: f32[640,320], index: 2, kind: input, shape index: {}]
  %s3 = inlined_call_operand.vmem [shape: f32[1,640], index: 3, kind: input, shape index: {}]
  %s4 = inlined_call_operand.vmem [shape: f32[1,320], index: 4, kind: input, shape index: {}]
  %s5 = inlined_call_operand.vmem [shape: f32[320,160], index: 5, kind: input, shape index: {}]
  %s6 = inlined_call_operand.vmem [shape: f32[1,160], index: 6, kind: input, shape index: {}]
  %s7 = inlined_call_operand.hbm [shape: f32[64,160], index: 7, kind: output, shape index: {}]
  %s8 = sld [smem:[#allocation0]]
  $region61: #{tpu_custom_call.1} parent=0
    _
  %s10 = ssub.s32 1, %s8
  %s11 = scalar_select 0, %s10, %s8
  $region1: #{tpu_custom_call.1} parent=0
    #allocation2 [shape = 'u8[65536]{0}', space=vmem, size = 0x10000, scoped, tag = 'output window, operand 0']
    #allocation3 [shape = 's32[2]{0}', space=sflag, size = 0x8, scoped, tag = 'scoped memory for tpu_custom_call.1']
    %12 = vsyncpa [#allocation3], 0
    %s13 = scalar_lea.sflag [#allocation3], 1
    %14 = vsyncpa %s13, 0
    loop: start=0, step=1, limit=4
    $region2: #{tpu_custom_call.1} parent=1 // loop_pre_header
      _
    $region3: #{tpu_custom_call.1} parent=1 // loop_header
      %s16 = sphi 0, %s20
      %p17 = scmp.ge.s32.totalorder %s16, 4
      %s26 = sphi 0, %s28
      %s29 = sphi 0, %s26
      %s30 = sphi 0, %s29
      %s46 = sphi 0, %s30
      %s50 = sphi 0, %s50
      %s52 = sphi 0, %s50
      %s53 = sphi 0, %s52
      %s67 = sphi 0, %s53
      %s71 = sphi 0, %s71
      %s73 = sphi 0, %s71
      %s74 = sphi 0, %s73
      %s88 = sphi 0, %s74
      %s92 = sphi 0, %s92
      %s94 = sphi 0, %s92
      %s95 = sphi 0, %s94
      %s109 = sphi 0, %s95
      %s113 = sphi 0, %s113
      %s115 = sphi 0, %s113
      %s116 = sphi 0, %s115
      %s130 = sphi 0, %s116
      %s134 = sphi 0, %s134
      %s136 = sphi 0, %s134
      %s137 = sphi 0, %s136
      %s151 = sphi 0, %s137
      %s155 = sphi 0, %s155
      %s157 = sphi 0, %s155
      %s158 = sphi 0, %s157
      %s172 = sphi 0, %s158
      %s178 = sphi 0, %s180
      %s181 = sphi 0, %s178
      %s182 = sphi 0, %s181
      %s198 = sphi 0, %s182
    $region4: #{tpu_custom_call.1} parent=1 // loop_header_branch
      %19 = sbr.rel (%p17) target = $region8
    $region5: #{tpu_custom_call.1} parent=1 // loop_body
      %s21 = ssub.s32 %s16, 1
      %s22 = ssub.s32 %s16, 2
      %s23 = sadd.s32 %s16, 1
      %s24 = ssub.s32 %s16, %s23
      %p25 = scmp.eq.s32.totalorder %s24, 0
      %s27 = sadd.s32 %s26, 1
      %s28 = scalar_select %p25, %s26, %s27
      %p31 = pneg %p25
      %p32 = scmp.eq.s32.totalorder %s16, 1
      %p33 = por %p31, %p32
      %p34 = scmp.ne.s32.totalorder %s26, %s29
      %p35 = scmp.eq.s32.totalorder %s16, 0
      %p36 = por %p34, %p35
      %p37 = scmp.ne.s32.totalorder %s26, %s29
      %p38 = scmp.eq.s32.totalorder %s21, 1
      %p39 = por %p37, %p38
      %p40 = scmp.ne.s32.totalorder %s29, %s30
      %p41 = scmp.eq.s32.totalorder %s21, 0
      %p42 = por %p40, %p41
      %p43 = scmp.ne.s32.totalorder %s29, %s30
      %p44 = scmp.eq.s32.totalorder %s22, 1
      %p45 = por %p43, %p44
      %p47 = scmp.ne.s32.totalorder %s30, %s46
      %p48 = scmp.eq.s32.totalorder %s22, 0
      %p49 = por %p47, %p48
      %s51 = sadd.s32 %s50, 1
      %p54 = scmp.eq.s32.totalorder %s16, 1
      %p55 = scmp.ne.s32.totalorder %s50, %s52
      %p56 = scmp.eq.s32.totalorder %s16, 0
      %p57 = por %p55, %p56
      %p58 = scmp.ne.s32.totalorder %s50, %s52
      %p59 = scmp.eq.s32.totalorder %s21, 1
      %p60 = por %p58, %p59
      %p61 = scmp.ne.s32.totalorder %s52, %s53
      %p62 = scmp.eq.s32.totalorder %s21, 0
      %p63 = por %p61, %p62
      %p64 = scmp.ne.s32.totalorder %s52, %s53
      %p65 = scmp.eq.s32.totalorder %s22, 1
      %p66 = por %p64, %p65
      %p68 = scmp.ne.s32.totalorder %s53, %s67
      %p69 = scmp.eq.s32.totalorder %s22, 0
      %p70 = por %p68, %p69
      %s72 = sadd.s32 %s71, 1
      %p75 = scmp.eq.s32.totalorder %s16, 1
      %p76 = scmp.ne.s32.totalorder %s71, %s73
      %p77 = scmp.eq.s32.totalorder %s16, 0
      %p78 = por %p76, %p77
      %p79 = scmp.ne.s32.totalorder %s71, %s73
      %p80 = scmp.eq.s32.totalorder %s21, 1
      %p81 = por %p79, %p80
      %p82 = scmp.ne.s32.totalorder %s73, %s74
      %p83 = scmp.eq.s32.totalorder %s21, 0
      %p84 = por %p82, %p83
      %p85 = scmp.ne.s32.totalorder %s73, %s74
      %p86 = scmp.eq.s32.totalorder %s22, 1
      %p87 = por %p85, %p86
      %p89 = scmp.ne.s32.totalorder %s74, %s88
      %p90 = scmp.eq.s32.totalorder %s22, 0
      %p91 = por %p89, %p90
      %s93 = sadd.s32 %s92, 1
      %p96 = scmp.eq.s32.totalorder %s16, 1
      %p97 = scmp.ne.s32.totalorder %s92, %s94
      %p98 = scmp.eq.s32.totalorder %s16, 0
      %p99 = por %p97, %p98
      %p100 = scmp.ne.s32.totalorder %s92, %s94
      %p101 = scmp.eq.s32.totalorder %s21, 1
      %p102 = por %p100, %p101
      %p103 = scmp.ne.s32.totalorder %s94, %s95
      %p104 = scmp.eq.s32.totalorder %s21, 0
      %p105 = por %p103, %p104
      %p106 = scmp.ne.s32.totalorder %s94, %s95
      %p107 = scmp.eq.s32.totalorder %s22, 1
      %p108 = por %p106, %p107
      %p110 = scmp.ne.s32.totalorder %s95, %s109
      %p111 = scmp.eq.s32.totalorder %s22, 0
      %p112 = por %p110, %p111
      %s114 = sadd.s32 %s113, 1
      %p117 = scmp.eq.s32.totalorder %s16, 1
      %p118 = scmp.ne.s32.totalorder %s113, %s115
      %p119 = scmp.eq.s32.totalorder %s16, 0
      %p120 = por %p118, %p119
      %p121 = scmp.ne.s32.totalorder %s113, %s115
      %p122 = scmp.eq.s32.totalorder %s21, 1
      %p123 = por %p121, %p122
      %p124 = scmp.ne.s32.totalorder %s115, %s116
      %p125 = scmp.eq.s32.totalorder %s21, 0
      %p126 = por %p124, %p125
      %p127 = scmp.ne.s32.totalorder %s115, %s116
      %p128 = scmp.eq.s32.totalorder %s22, 1
      %p129 = por %p127, %p128
      %p131 = scmp.ne.s32.totalorder %s116, %s130
      %p132 = scmp.eq.s32.totalorder %s22, 0
      %p133 = por %p131, %p132
      %s135 = sadd.s32 %s134, 1
      %p138 = scmp.eq.s32.totalorder %s16, 1
      %p139 = scmp.ne.s32.totalorder %s134, %s136
      %p140 = scmp.eq.s32.totalorder %s16, 0
      %p141 = por %p139, %p140
      %p142 = scmp.ne.s32.totalorder %s134, %s136
      %p143 = scmp.eq.s32.totalorder %s21, 1
      %p144 = por %p142, %p143
      %p145 = scmp.ne.s32.totalorder %s136, %s137
      %p146 = scmp.eq.s32.totalorder %s21, 0
      %p147 = por %p145, %p146
      %p148 = scmp.ne.s32.totalorder %s136, %s137
      %p149 = scmp.eq.s32.totalorder %s22, 1
      %p150 = por %p148, %p149
      %p152 = scmp.ne.s32.totalorder %s137, %s151
      %p153 = scmp.eq.s32.totalorder %s22, 0
      %p154 = por %p152, %p153
      %s156 = sadd.s32 %s155, 1
      %p159 = scmp.eq.s32.totalorder %s16, 1
      %p160 = scmp.ne.s32.totalorder %s155, %s157
      %p161 = scmp.eq.s32.totalorder %s16, 0
      %p162 = por %p160, %p161
      %p163 = scmp.ne.s32.totalorder %s155, %s157
      %p164 = scmp.eq.s32.totalorder %s21, 1
      %p165 = por %p163, %p164
      %p166 = scmp.ne.s32.totalorder %s157, %s158
      %p167 = scmp.eq.s32.totalorder %s21, 0
      %p168 = por %p166, %p167
      %p169 = scmp.ne.s32.totalorder %s157, %s158
      %p170 = scmp.eq.s32.totalorder %s22, 1
      %p171 = por %p169, %p170
      %p173 = scmp.ne.s32.totalorder %s158, %s172
      %p174 = scmp.eq.s32.totalorder %s22, 0
      %p175 = por %p173, %p174
      %s176 = ssub.s32 %s16, %s23
      %p177 = scmp.eq.s32.totalorder %s176, 0
      %s179 = sadd.s32 %s178, 1
      %s180 = scalar_select %p177, %s178, %s179
      %p183 = pneg %p177
      %p184 = scmp.eq.s32.totalorder %s16, 1
      %p185 = por %p183, %p184
      %p186 = scmp.ne.s32.totalorder %s178, %s181
      %p187 = scmp.eq.s32.totalorder %s16, 0
      %p188 = por %p186, %p187
      %p189 = scmp.ne.s32.totalorder %s178, %s181
      %p190 = scmp.eq.s32.totalorder %s21, 1
      %p191 = por %p189, %p190
      %p192 = scmp.ne.s32.totalorder %s181, %s182
      %p193 = scmp.eq.s32.totalorder %s21, 0
      %p194 = por %p192, %p193
      %p195 = scmp.ne.s32.totalorder %s181, %s182
      %p196 = scmp.eq.s32.totalorder %s22, 1
      %p197 = por %p195, %p196
      %p199 = scmp.ne.s32.totalorder %s182, %s198
      %p200 = scmp.eq.s32.totalorder %s22, 0
      %p201 = por %p199, %p200
      %p202 = scmp.le.s32.totalorder 1, %s16
      %p203 = scmp.lt.s32.totalorder %s16, 3
      %p204 = pnand %p202, %p203
      %p205 = pneg %p204
      // Predicated region
      $region9: #{tpu_custom_call.1} parent=5 // pred_check
        _
      $region10: #{tpu_custom_call.1} parent=5 // pred_check_branch
        %207 = sbr.rel (%p204) target = $region12
      $region11: #{tpu_custom_call.1} parent=5 // pred_region
        %s208 = ssub.s32 %s16, 1
        // Predicated region
        $region13: #{tpu_custom_call.1} parent=11 // pred_check
          %p209 = pneg %p63
        $region14: #{tpu_custom_call.1} parent=11 // pred_check_branch
          %211 = sbr.rel (%p209) target = $region16
        $region15: #{tpu_custom_call.1} parent=11 // pred_region
          _
        $region16: #{tpu_custom_call.1} parent=11 // pred_fallthru
          _
        // Predicated region
        $region17: #{tpu_custom_call.1} parent=11 // pred_check
          %p212 = pneg %p84
        $region18: #{tpu_custom_call.1} parent=11 // pred_check_branch
          %214 = sbr.rel (%p212) target = $region20
        $region19: #{tpu_custom_call.1} parent=11 // pred_region
          _
        $region20: #{tpu_custom_call.1} parent=11 // pred_fallthru
          _
        // Predicated region
        $region21: #{tpu_custom_call.1} parent=11 // pred_check
          %p215 = pneg %p105
        $region22: #{tpu_custom_call.1} parent=11 // pred_check_branch
          %217 = sbr.rel (%p215) target = $region24
        $region23: #{tpu_custom_call.1} parent=11 // pred_region
          _
        $region24: #{tpu_custom_call.1} parent=11 // pred_fallthru
          _
        // Predicated region
        $region25: #{tpu_custom_call.1} parent=11 // pred_check
          %p218 = pneg %p126
        $region26: #{tpu_custom_call.1} parent=11 // pred_check_branch
          %220 = sbr.rel (%p218) target = $region28
        $region27: #{tpu_custom_call.1} parent=11 // pred_region
          _
        $region28: #{tpu_custom_call.1} parent=11 // pred_fallthru
          _
        // Predicated region
        $region29: #{tpu_custom_call.1} parent=11 // pred_check
          %p221 = pneg %p147
        $region30: #{tpu_custom_call.1} parent=11 // pred_check_branch
          %223 = sbr.rel (%p221) target = $region32
        $region31: #{tpu_custom_call.1} parent=11 // pred_region
          _
        $region32: #{tpu_custom_call.1} parent=11 // pred_fallthru
          _
        // Predicated region
        $region33: #{tpu_custom_call.1} parent=11 // pred_check
          %p224 = pneg %p168
        $region34: #{tpu_custom_call.1} parent=11 // pred_check_branch
          %226 = sbr.rel (%p224) target = $region36
        $region35: #{tpu_custom_call.1} parent=11 // pred_region
          _
        $region36: #{tpu_custom_call.1} parent=11 // pred_fallthru
          _
      $region12: #{tpu_custom_call.1} parent=5 // pred_fallthru
        _
      %p227 = scmp.lt.s32.totalorder %s16, 2
      // Predicated region
      $region37: #{tpu_custom_call.1} parent=5 // pred_check
        %p228 = pneg %p227
      $region38: #{tpu_custom_call.1} parent=5 // pred_check_branch
        %230 = sbr.rel (%p228) target = $region40
      $region39: #{tpu_custom_call.1} parent=5 // pred_region
        // Predicated region
        $region41: #{tpu_custom_call.1} parent=39 // pred_check
          %p231 = pneg %p36
        $region42: #{tpu_custom_call.1} parent=39 // pred_check_branch
          %233 = sbr.rel (%p231) target = $region44
        $region43: #{tpu_custom_call.1} parent=39 // pred_region
          %s234 = smul.u32 4, %s16
          %p235 = scmp.lt.s32.totalorder %s234, 7
          %s236 = scalar_select %p235, %s234, 7
          %s237 = smul.addr %s236, 3
          %s238 = smul.addr %s237, 8
          %s239 = scalar_lea.vmem %s0, %s238
          %s240 = smul.u32 4, %s16
        $region44: #{tpu_custom_call.1} parent=39 // pred_fallthru
          _
      $region40: #{tpu_custom_call.1} parent=5 // pred_fallthru
        _
      %p241 = scmp.le.s32.totalorder 1, %s16
      %p242 = scmp.lt.s32.totalorder %s16, 3
      %p243 = pnand %p241, %p242
      %p244 = pneg %p243
      // Predicated region
      $region45: #{tpu_custom_call.1} parent=5 // pred_check
        _
      $region46: #{tpu_custom_call.1} parent=5 // pred_check_branch
        %246 = sbr.rel (%p243) target = $region48
      $region47: #{tpu_custom_call.1} parent=5 // pred_region
        %s247 = ssub.s32 %s16, 1
        %s248 = smul.u32 4, %s21
        %p249 = scmp.lt.s32.totalorder %s248, 7
        %s250 = scalar_select %p249, %s248, 7
        %s251 = smul.addr %s250, 3
        %s252 = smul.addr %s251, 8
        %s253 = scalar_lea.vmem %s0, %s252
        %p254 = pneg %p42
        %p255 = pneg %p39
        %p256 = pneg %p63
        %p257 = pneg %p60
        %p258 = pneg %p84
        %p259 = pneg %p81
        %p260 = pneg %p105
        %p261 = pneg %p102
        %p262 = pneg %p126
        %p263 = pneg %p123
        %p264 = pneg %p147
        %p265 = pneg %p144
        %p266 = pneg %p168
        %p267 = pneg %p165
        %p268 = pneg %p194
        %p269 = pneg %p191
        %s270 = sand.u32 %s181, 1
        %s271 = scalar_lea.sflag [#allocation3], %s270
        %s272 = sand.u32 %s181, 1
        %s273 = smul.addr %s272, 64
        %s274 = scalar_lea.vmem [#allocation2], %s273
        %s275 = smul.u32 4, %s21
        %p276 = scmp.lt.s32.totalorder %s275, 7
        %s277 = scalar_select %p276, %s275, 7
        %s278 = smul.addr %s277, 3
        %s279 = smul.addr %s278, 8
        %s280 = scalar_lea.vmem %s0, %s279
        %s281 = smul.u32 4, %s21
        %s282 = smul.u32 4, %s21
        %v283 = vld [vmem:[%s280] sm:$0xff]
        %v284 = vld [vmem:[%s280 + $0x8] sm:$0xff]
        %v285 = vld [vmem:[%s280 + $0x10] sm:$0xff]
        %v286 = vld [vmem:[%s280 + $0x18] sm:$0xff]
        %v287 = vld [vmem:[%s280 + $0x20] sm:$0xff]
        %v288 = vld [vmem:[%s280 + $0x28] sm:$0xff]
        %v289 = vld [vmem:[%s280 + $0x30] sm:$0xff]
        %v290 = vld [vmem:[%s280 + $0x38] sm:$0xff]
        %v291 = vld [vmem:[%s280 + $0x40] sm:$0xff]
        %v292 = vld [vmem:[%s280 + $0x48] sm:$0xff]
        %v293 = vld [vmem:[%s280 + $0x50] sm:$0xff]
        %v294 = vld [vmem:[%s280 + $0x58] sm:$0xff]
        %v295 = vld [vmem:[%s1] sm:$0xff]
        %v296 = vld [vmem:[%s1 + $0x8] sm:$0xff]
        %v297 = vld [vmem:[%s1 + $0x10] sm:$0xff]
        %v298 = vld [vmem:[%s1 + $0x18] sm:$0xff]
        %v299 = vld [vmem:[%s1 + $0x20] sm:$0xff]
        %v300 = vld [vmem:[%s1 + $0x28] sm:$0xff]
        %v301 = vld [vmem:[%s1 + $0x30] sm:$0xff]
        %v302 = vld [vmem:[%s1 + $0x38] sm:$0xff]
        %v303 = vld [vmem:[%s1 + $0x40] sm:$0xff]
        %v304 = vld [vmem:[%s1 + $0x48] sm:$0xff]
        %v305 = vld [vmem:[%s1 + $0x50] sm:$0xff]
        %v306 = vld [vmem:[%s1 + $0x58] sm:$0xff]
        %v307 = vld [vmem:[%s1 + $0x60] sm:$0xff]
        %v308 = vld [vmem:[%s1 + $0x68] sm:$0xff]
        %v309 = vld [vmem:[%s1 + $0x70] sm:$0xff]
        %v310 = vld [vmem:[%s1 + $0x78] sm:$0xff]
        %v311 = vld [vmem:[%s1 + $0x80] sm:$0xff]
        %v312 = vld [vmem:[%s1 + $0x88] sm:$0xff]
        %v313 = vld [vmem:[%s1 + $0x90] sm:$0xff]
        %v314 = vld [vmem:[%s1 + $0x98] sm:$0xff]
        %v315 = vld [vmem:[%s1 + $0xa0] sm:$0xff]
        %v316 = vld [vmem:[%s1 + $0xa8] sm:$0xff]
        %v317 = vld [vmem:[%s1 + $0xb0] sm:$0xff]
        %v318 = vld [vmem:[%s1 + $0xb8] sm:$0xff]
        %v319 = vld [vmem:[%s1 + $0xc0] sm:$0xff]
        %v320 = vld [vmem:[%s1 + $0xc8] sm:$0xff]
        %v321 = vld [vmem:[%s1 + $0xd0] sm:$0xff]
        %v322 = vld [vmem:[%s1 + $0xd8] sm:$0xff]
        %v323 = vld [vmem:[%s1 + $0xe0] sm:$0xff]
        %v324 = vld [vmem:[%s1 + $0xe8] sm:$0xff]
        %v325 = vld [vmem:[%s1 + $0xf0] sm:$0xff]
        %v326 = vld [vmem:[%s1 + $0xf8] sm:$0xff]
        %v327 = vld [vmem:[%s1 + $0x100] sm:$0xff]
        %v328 = vld [vmem:[%s1 + $0x108] sm:$0xff]
        %v329 = vld [vmem:[%s1 + $0x110] sm:$0xff]
        %v330 = vld [vmem:[%s1 + $0x118] sm:$0xff]
        %v331 = vld [vmem:[%s1 + $0x120] sm:$0xff]
        %v332 = vld [vmem:[%s1 + $0x128] sm:$0xff]
        %v333 = vld [vmem:[%s1 + $0x130] sm:$0xff]
        %v334 = vld [vmem:[%s1 + $0x138] sm:$0xff]
        %v335 = vld [vmem:[%s1 + $0x140] sm:$0xff]
        %v336 = vld [vmem:[%s1 + $0x148] sm:$0xff]
        %v337 = vld [vmem:[%s1 + $0x150] sm:$0xff]
        %v338 = vld [vmem:[%s1 + $0x158] sm:$0xff]
        %v339 = vld [vmem:[%s1 + $0x160] sm:$0xff]
        %v340 = vld [vmem:[%s1 + $0x168] sm:$0xff]
        %v341 = vld [vmem:[%s1 + $0x170] sm:$0xff]
        %v342 = vld [vmem:[%s1 + $0x178] sm:$0xff]
        %v343 = vld [vmem:[%s1 + $0x180] sm:$0xff]
        %v344 = vld [vmem:[%s1 + $0x188] sm:$0xff]
        %v345 = vld [vmem:[%s1 + $0x190] sm:$0xff]
        %v346 = vld [vmem:[%s1 + $0x198] sm:$0xff]
        %v347 = vld [vmem:[%s1 + $0x1a0] sm:$0xff]
        %v348 = vld [vmem:[%s1 + $0x1a8] sm:$0xff]
        %v349 = vld [vmem:[%s1 + $0x1b0] sm:$0xff]
        %v350 = vld [vmem:[%s1 + $0x1b8] sm:$0xff]
        %v351 = vld [vmem:[%s1 + $0x1c0] sm:$0xff]
        %v352 = vld [vmem:[%s1 + $0x1c8] sm:$0xff]
        %v353 = vld [vmem:[%s1 + $0x1d0] sm:$0xff]
        %v354 = vld [vmem:[%s1 + $0x1d8] sm:$0xff]
        %v355 = vld [vmem:[%s1 + $0x1e0] sm:$0xff]
        %v356 = vld [vmem:[%s1 + $0x1e8] sm:$0xff]
        %v357 = vld [vmem:[%s1 + $0x1f0] sm:$0xff]
        %v358 = vld [vmem:[%s1 + $0x1f8] sm:$0xff]
        %v359 = vld [vmem:[%s1 + $0x200] sm:$0xff]
        %v360 = vld [vmem:[%s1 + $0x208] sm:$0xff]
        %v361 = vld [vmem:[%s1 + $0x210] sm:$0xff]
        %v362 = vld [vmem:[%s1 + $0x218] sm:$0xff]
        %v363 = vld [vmem:[%s1 + $0x220] sm:$0xff]
        %v364 = vld [vmem:[%s1 + $0x228] sm:$0xff]
        %v365 = vld [vmem:[%s1 + $0x230] sm:$0xff]
        %v366 = vld [vmem:[%s1 + $0x238] sm:$0xff]
        %v367 = vld [vmem:[%s1 + $0x240] sm:$0xff]
        %v368 = vld [vmem:[%s1 + $0x248] sm:$0xff]
        %v369 = vld [vmem:[%s1 + $0x250] sm:$0xff]
        %v370 = vld [vmem:[%s1 + $0x258] sm:$0xff]
        %v371 = vld [vmem:[%s1 + $0x260] sm:$0xff]
        %v372 = vld [vmem:[%s1 + $0x268] sm:$0xff]
        %v373 = vld [vmem:[%s1 + $0x270] sm:$0xff]
        %v374 = vld [vmem:[%s1 + $0x278] sm:$0xff]
        %v375 = vld [vmem:[%s1 + $0x280] sm:$0xff]
        %v376 = vld [vmem:[%s1 + $0x288] sm:$0xff]
        %v377 = vld [vmem:[%s1 + $0x290] sm:$0xff]
        %v378 = vld [vmem:[%s1 + $0x298] sm:$0xff]
        %v379 = vld [vmem:[%s1 + $0x2a0] sm:$0xff]
        %v380 = vld [vmem:[%s1 + $0x2a8] sm:$0xff]
        %v381 = vld [vmem:[%s1 + $0x2b0] sm:$0xff]
        %v382 = vld [vmem:[%s1 + $0x2b8] sm:$0xff]
        %v383 = vld [vmem:[%s1 + $0x2c0] sm:$0xff]
        %v384 = vld [vmem:[%s1 + $0x2c8] sm:$0xff]
        %v385 = vld [vmem:[%s1 + $0x2d0] sm:$0xff]
        %v386 = vld [vmem:[%s1 + $0x2d8] sm:$0xff]
        %v387 = vld [vmem:[%s1 + $0x2e0] sm:$0xff]
        %v388 = vld [vmem:[%s1 + $0x2e8] sm:$0xff]
        %v389 = vld [vmem:[%s1 + $0x2f0] sm:$0xff]
        %v390 = vld [vmem:[%s1 + $0x2f8] sm:$0xff]
        %v391 = vld [vmem:[%s1 + $0x300] sm:$0xff]
        %v392 = vld [vmem:[%s1 + $0x308] sm:$0xff]
        %v393 = vld [vmem:[%s1 + $0x310] sm:$0xff]
        %v394 = vld [vmem:[%s1 + $0x318] sm:$0xff]
        %v395 = vld [vmem:[%s1 + $0x320] sm:$0xff]
        %v396 = vld [vmem:[%s1 + $0x328] sm:$0xff]
        %v397 = vld [vmem:[%s1 + $0x330] sm:$0xff]
        %v398 = vld [vmem:[%s1 + $0x338] sm:$0xff]
        %v399 = vld [vmem:[%s1 + $0x340] sm:$0xff]
        %v400 = vld [vmem:[%s1 + $0x348] sm:$0xff]
        %v401 = vld [vmem:[%s1 + $0x350] sm:$0xff]
        %v402 = vld [vmem:[%s1 + $0x358] sm:$0xff]
        %v403 = vld [vmem:[%s1 + $0x360] sm:$0xff]
        %v404 = vld [vmem:[%s1 + $0x368] sm:$0xff]
        %v405 = vld [vmem:[%s1 + $0x370] sm:$0xff]
        %v406 = vld [vmem:[%s1 + $0x378] sm:$0xff]
        %v407 = vld [vmem:[%s1 + $0x380] sm:$0xff]
        %v408 = vld [vmem:[%s1 + $0x388] sm:$0xff]
        %v409 = vld [vmem:[%s1 + $0x390] sm:$0xff]
        %v410 = vld [vmem:[%s1 + $0x398] sm:$0xff]
        %v411 = vld [vmem:[%s1 + $0x3a0] sm:$0xff]
        %v412 = vld [vmem:[%s1 + $0x3a8] sm:$0xff]
        %v413 = vld [vmem:[%s1 + $0x3b0] sm:$0xff]
        %v414 = vld [vmem:[%s1 + $0x3b8] sm:$0xff]
        %v415 = vld [vmem:[%s1 + $0x3c0] sm:$0xff]
        %v416 = vld [vmem:[%s1 + $0x3c8] sm:$0xff]
        %v417 = vld [vmem:[%s1 + $0x3d0] sm:$0xff]
        %v418 = vld [vmem:[%s1 + $0x3d8] sm:$0xff]
        %v419 = vld [vmem:[%s1 + $0x3e0] sm:$0xff]
        %v420 = vld [vmem:[%s1 + $0x3e8] sm:$0xff]
        %v421 = vld [vmem:[%s1 + $0x3f0] sm:$0xff]
        %v422 = vld [vmem:[%s1 + $0x3f8] sm:$0xff]
        %v423 = vld [vmem:[%s1 + $0x400] sm:$0xff]
        %v424 = vld [vmem:[%s1 + $0x408] sm:$0xff]
        %v425 = vld [vmem:[%s1 + $0x410] sm:$0xff]
        %v426 = vld [vmem:[%s1 + $0x418] sm:$0xff]
        %v427 = vld [vmem:[%s1 + $0x420] sm:$0xff]
        %v428 = vld [vmem:[%s1 + $0x428] sm:$0xff]
        %v429 = vld [vmem:[%s1 + $0x430] sm:$0xff]
        %v430 = vld [vmem:[%s1 + $0x438] sm:$0xff]
        %v431 = vld [vmem:[%s1 + $0x440] sm:$0xff]
        %v432 = vld [vmem:[%s1 + $0x448] sm:$0xff]
        %v433 = vld [vmem:[%s1 + $0x450] sm:$0xff]
        %v434 = vld [vmem:[%s1 + $0x458] sm:$0xff]
        %v435 = vld [vmem:[%s1 + $0x460] sm:$0xff]
        %v436 = vld [vmem:[%s1 + $0x468] sm:$0xff]
        %v437 = vld [vmem:[%s1 + $0x470] sm:$0xff]
        %v438 = vld [vmem:[%s1 + $0x478] sm:$0xff]
        %v439 = vld [vmem:[%s1 + $0x480] sm:$0xff]
        %v440 = vld [vmem:[%s1 + $0x488] sm:$0xff]
        %v441 = vld [vmem:[%s1 + $0x490] sm:$0xff]
        %v442 = vld [vmem:[%s1 + $0x498] sm:$0xff]
        %v443 = vld [vmem:[%s1 + $0x4a0] sm:$0xff]
        %v444 = vld [vmem:[%s1 + $0x4a8] sm:$0xff]
        %v445 = vld [vmem:[%s1 + $0x4b0] sm:$0xff]
        %v446 = vld [vmem:[%s1 + $0x4b8] sm:$0xff]
        %v447 = vld [vmem:[%s1 + $0x4c0] sm:$0xff]
        %v448 = vld [vmem:[%s1 + $0x4c8] sm:$0xff]
        %v449 = vld [vmem:[%s1 + $0x4d0] sm:$0xff]
        %v450 = vld [vmem:[%s1 + $0x4d8] sm:$0xff]
        %v451 = vld [vmem:[%s1 + $0x4e0] sm:$0xff]
        %v452 = vld [vmem:[%s1 + $0x4e8] sm:$0xff]
        %v453 = vld [vmem:[%s1 + $0x4f0] sm:$0xff]
        %v454 = vld [vmem:[%s1 + $0x4f8] sm:$0xff]
        %v455 = vld [vmem:[%s1 + $0x500] sm:$0xff]
        %v456 = vld [vmem:[%s1 + $0x508] sm:$0xff]
        %v457 = vld [vmem:[%s1 + $0x510] sm:$0xff]
        %v458 = vld [vmem:[%s1 + $0x518] sm:$0xff]
        %v459 = vld [vmem:[%s1 + $0x520] sm:$0xff]
        %v460 = vld [vmem:[%s1 + $0x528] sm:$0xff]
        %v461 = vld [vmem:[%s1 + $0x530] sm:$0xff]
        %v462 = vld [vmem:[%s1 + $0x538] sm:$0xff]
        %v463 = vld [vmem:[%s1 + $0x540] sm:$0xff]
        %v464 = vld [vmem:[%s1 + $0x548] sm:$0xff]
        %v465 = vld [vmem:[%s1 + $0x550] sm:$0xff]
        %v466 = vld [vmem:[%s1 + $0x558] sm:$0xff]
        %v467 = vld [vmem:[%s1 + $0x560] sm:$0xff]
        %v468 = vld [vmem:[%s1 + $0x568] sm:$0xff]
        %v469 = vld [vmem:[%s1 + $0x570] sm:$0xff]
        %v470 = vld [vmem:[%s1 + $0x578] sm:$0xff]
        %v471 = vld [vmem:[%s1 + $0x580] sm:$0xff]
        %v472 = vld [vmem:[%s1 + $0x588] sm:$0xff]
        %v473 = vld [vmem:[%s1 + $0x590] sm:$0xff]
        %v474 = vld [vmem:[%s1 + $0x598] sm:$0xff]
        %v475 = vld [vmem:[%s1 + $0x5a0] sm:$0xff]
        %v476 = vld [vmem:[%s1 + $0x5a8] sm:$0xff]
        %v477 = vld [vmem:[%s1 + $0x5b0] sm:$0xff]
        %v478 = vld [vmem:[%s1 + $0x5b8] sm:$0xff]
        %v479 = vld [vmem:[%s1 + $0x5c0] sm:$0xff]
        %v480 = vld [vmem:[%s1 + $0x5c8] sm:$0xff]
        %v481 = vld [vmem:[%s1 + $0x5d0] sm:$0xff]
        %v482 = vld [vmem:[%s1 + $0x5d8] sm:$0xff]
        %v483 = vld [vmem:[%s1 + $0x5e0] sm:$0xff]
        %v484 = vld [vmem:[%s1 + $0x5e8] sm:$0xff]
        %v485 = vld [vmem:[%s1 + $0x5f0] sm:$0xff]
        %v486 = vld [vmem:[%s1 + $0x5f8] sm:$0xff]
        %v487 = vld [vmem:[%s1 + $0x600] sm:$0xff]
        %v488 = vld [vmem:[%s1 + $0x608] sm:$0xff]
        %v489 = vld [vmem:[%s1 + $0x610] sm:$0xff]
        %v490 = vld [vmem:[%s1 + $0x618] sm:$0xff]
        %v491 = vld [vmem:[%s1 + $0x620] sm:$0xff]
        %v492 = vld [vmem:[%s1 + $0x628] sm:$0xff]
        %v493 = vld [vmem:[%s1 + $0x630] sm:$0xff]
        %v494 = vld [vmem:[%s1 + $0x638] sm:$0xff]
        %v495 = vld [vmem:[%s3] sm:$0x1f]
        %v497 = vlaneseq
        %v498 = vshrl.u32 %v497, 7
        %v499 = vsub.s32 0, %v498
        %v500 = vrot.slane %v495, %v499
        %v501 = vlaneseq
        %v502 = vshrl.u32 %v501, 7
        %v503 = vsub.s32 1, %v502
        %v504 = vrot.slane %v495, %v503
        %v505 = vlaneseq
        %v506 = vshrl.u32 %v505, 7
        %v507 = vsub.s32 2, %v506
        %v508 = vrot.slane %v495, %v507
        %v509 = vlaneseq
        %v510 = vshrl.u32 %v509, 7
        %v511 = vsub.s32 3, %v510
        %v512 = vrot.slane %v495, %v511
        %v513 = vlaneseq
        %v514 = vshrl.u32 %v513, 7
        %v515 = vsub.s32 4, %v514
        %v516 = vrot.slane %v495, %v515
        %vm522 = vcmask 523264
        %v524 = vsel %vm522, %v285, 0
        %v527 = vsel %vm522, %v288, 0
        %v530 = vsel %vm522, %v291, 0
        %v533 = vsel %vm522, %v294, 0
        %535 = vmatprep.subr.mxu0 %v296
        %536 = vmatpush1.msra.mxu0 %v295
        %537 = vmatprep.subr.mxu0 %v301
        %538 = vmatpush1.msra.mxu0 %v300
        %539 = vmatprep.subr.mxu0 %v306
        %540 = vmatpush1.msra.mxu0 %v305
        %541 = vmatprep.subr.mxu0 %v311
        %542 = vmatpush1.msra.mxu0 %v310
        %543 = vmatprep.subr.mxu0 %v316
        %544 = vmatpush1.msra.mxu0 %v315
        %545 = vmatprep.subr.mxu0 %v321
        %546 = vmatpush1.msra.mxu0 %v320
        %547 = vmatprep.subr.mxu0 %v326
        %548 = vmatpush1.msra.mxu0 %v325
        %549 = vmatprep.subr.mxu0 %v331
        %550 = vmatpush1.msra.mxu0 %v330
        %551 = vmatprep.subr.mxu0 %v336
        %552 = vmatpush1.msra.mxu0 %v335
        %553 = vmatprep.subr.mxu0 %v341
        %554 = vmatpush1.msra.mxu0 %v340
        %555 = vmatprep.subr.mxu0 %v346
        %556 = vmatpush1.msra.mxu0 %v345
        %557 = vmatprep.subr.mxu0 %v351
        %558 = vmatpush1.msra.mxu0 %v350
        %559 = vmatprep.subr.mxu0 %v356
        %560 = vmatpush1.msra.mxu0 %v355
        %561 = vmatprep.subr.mxu0 %v361
        %562 = vmatpush1.msra.mxu0 %v360
        %563 = vmatprep.subr.mxu0 %v366
        %564 = vmatpush1.msra.mxu0 %v365
        %565 = vmatprep.subr.mxu0 %v371
        %566 = vmatpush1.msra.mxu0 %v370
        %567 = vmatprep.subr.mxu0 %v376
        %568 = vmatpush1.msra.mxu0 %v375
        %569 = vmatprep.subr.mxu0 %v381
        %570 = vmatpush1.msra.mxu0 %v380
        %571 = vmatprep.subr.mxu0 %v386
        %572 = vmatpush1.msra.mxu0 %v385
        %573 = vmatprep.subr.mxu0 %v391
        %574 = vmatpush1.msra.mxu0 %v390
        %575 = vmatprep.subr.mxu0 %v396
        %576 = vmatpush1.msra.mxu0 %v395
        %577 = vmatprep.subr.mxu0 %v401
        %578 = vmatpush1.msra.mxu0 %v400
        %579 = vmatprep.subr.mxu0 %v406
        %580 = vmatpush1.msra.mxu0 %v405
        %581 = vmatprep.subr.mxu0 %v411
        %582 = vmatpush1.msra.mxu0 %v410
        %583 = vmatprep.subr.mxu0 %v416
        %584 = vmatpush1.msra.mxu0 %v415
        %585 = vmatprep.subr.mxu0 %v421
        %586 = vmatpush1.msra.mxu0 %v420
        %587 = vmatprep.subr.mxu0 %v426
        %588 = vmatpush1.msra.mxu0 %v425
        %589 = vmatprep.subr.mxu0 %v431
        %590 = vmatpush1.msra.mxu0 %v430
        %591 = vmatprep.subr.mxu0 %v436
        %592 = vmatpush1.msra.mxu0 %v435
        %593 = vmatprep.subr.mxu0 %v441
        %594 = vmatpush1.msra.mxu0 %v440
        %595 = vmatprep.subr.mxu0 %v446
        %596 = vmatpush1.msra.mxu0 %v445
        %597 = vmatprep.subr.mxu0 %v451
        %598 = vmatpush1.msra.mxu0 %v450
        %599 = vmatprep.mubr.f32.mxu0 %v284
        %600 = vmatmul.mubr.f32.gmra.mrb[0].mxu0 %v283
        %v601 = vpop.f32.mrb[0].mxu0
        %v602 = vadd.f32 %v500, %v601
        %v603 = vpop.f32.mrb[0].mxu0
        %v604 = vadd.f32 %v504, %v603
        %605 = vmatprep.mubr.f32.mxu0 %v287
        %606 = vmatmul.mubr.f32.gmra.mrb[0].mxu0 %v286
        %v607 = vpop.f32.mrb[0].mxu0
        %v608 = vadd.f32 %v500, %v607
        %v609 = vpop.f32.mrb[0].mxu0
        %v610 = vadd.f32 %v504, %v609
        %611 = vmatprep.mubr.f32.mxu0 %v290
        %612 = vmatmul.mubr.f32.gmra.mrb[0].mxu0 %v289
        %v613 = vpop.f32.mrb[0].mxu0
        %v614 = vadd.f32 %v500, %v613
        %v615 = vpop.f32.mrb[0].mxu0
        %v616 = vadd.f32 %v504, %v615
        %617 = vmatprep.mubr.f32.mxu0 %v293
        %618 = vmatmul.mubr.f32.gmra.mrb[0].mxu0 %v292
        %v619 = vpop.f32.mrb[0].mxu0
        %v620 = vadd.f32 %v500, %v619
        %v621 = vpop.f32.mrb[0].mxu0
        %v622 = vadd.f32 %v504, %v621
        %623 = vdwg.mxu0
        %624 = vmatprep.subr.mxu0 %v456
        %625 = vmatpush1.msra.mxu0 %v455
        %626 = vmatprep.subr.mxu0 %v461
        %627 = vmatpush1.msra.mxu0 %v460
        %628 = vmatprep.subr.mxu0 %v466
        %629 = vmatpush1.msra.mxu0 %v465
        %630 = vmatprep.subr.mxu0 %v471
        %631 = vmatpush1.msra.mxu0 %v470
        %632 = vmatprep.subr.mxu0 %v476
        %633 = vmatpush1.msra.mxu0 %v475
        %634 = vmatprep.subr.mxu0 %v481
        %635 = vmatpush1.msra.mxu0 %v480
        %636 = vmatprep.subr.mxu0 %v486
        %637 = vmatpush1.msra.mxu0 %v485
        %638 = vmatprep.subr.mxu0 %v491
        %639 = vmatpush1.msra.mxu0 %v490
        %640 = vmatprep.subr.mxu0 0.0
        %641 = vmatpush1.msra.mxu0 0.0
        %642 = vmatprep.subr.mxu0 0.0
        %643 = vmatpush1.msra.mxu0 0.0
        %644 = vmatprep.subr.mxu0 0.0
        %645 = vmatpush1.msra.mxu0 0.0
        %646 = vmatprep.subr.mxu0 0.0
        %647 = vmatpush1.msra.mxu0 0.0
        %648 = vmatprep.subr.mxu0 0.0
        %649 = vmatpush1.msra.mxu0 0.0
        %650 = vmatprep.subr.mxu0 0.0
        %651 = vmatpush1.msra.mxu0 0.0
        %652 = vmatprep.subr.mxu0 0.0
        %653 = vmatpush1.msra.mxu0 0.0
        %654 = vmatprep.subr.mxu0 0.0
        %655 = vmatpush1.msra.mxu0 0.0
        %656 = vmatprep.subr.mxu0 0.0
        %657 = vmatpush1.msra.mxu0 0.0
        %658 = vmatprep.subr.mxu0 0.0
        %659 = vmatpush1.msra.mxu0 0.0
        %660 = vmatprep.subr.mxu0 0.0
        %661 = vmatpush1.msra.mxu0 0.0
        %662 = vmatprep.subr.mxu0 0.0
        %663 = vmatpush1.msra.mxu0 0.0
        %664 = vmatprep.subr.mxu0 0.0
        %665 = vmatpush1.msra.mxu0 0.0
        %666 = vmatprep.subr.mxu0 0.0
        %667 = vmatpush1.msra.mxu0 0.0
        %668 = vmatprep.subr.mxu0 0.0
        %669 = vmatpush1.msra.mxu0 0.0
        %670 = vmatprep.subr.mxu0 0.0
        %671 = vmatpush1.msra.mxu0 0.0
        %672 = vmatprep.subr.mxu0 0.0
        %673 = vmatpush1.msra.mxu0 0.0
        %674 = vmatprep.subr.mxu0 0.0
        %675 = vmatpush1.msra.mxu0 0.0
        %676 = vmatprep.subr.mxu0 0.0
        %677 = vmatpush1.msra.mxu0 0.0
        %678 = vmatprep.subr.mxu0 0.0
        %679 = vmatpush1.msra.mxu0 0.0
        %680 = vmatprep.subr.mxu0 0.0
        %681 = vmatpush1.msra.mxu0 0.0
        %682 = vmatprep.subr.mxu0 0.0
        %683 = vmatpush1.msra.mxu0 0.0
        %684 = vmatprep.subr.mxu0 0.0
        %685 = vmatpush1.msra.mxu0 0.0
        %686 = vmatprep.subr.mxu0 0.0
        %687 = vmatpush1.msra.mxu0 0.0
        %688 = vmatprep.mubr.f32.mxu0 0.0
        %689 = vmatmul.mubr.f32.gmra.mrb[0].mxu0 %v524
        %v690 = vpop.f32.mrb[0].mxu0
        %v691 = vadd.f32 %v602, %v690
        %v692 = vpop.f32.mrb[0].mxu0
        %v693 = vadd.f32 %v604, %v692
        %694 = vmatprep.mubr.f32.mxu0 0.0
        %695 = vmatmul.mubr.f32.gmra.mrb[0].mxu0 %v527
        %v696 = vpop.f32.mrb[0].mxu0
        %v697 = vadd.f32 %v608, %v696
        %v698 = vpop.f32.mrb[0].mxu0
        %v699 = vadd.f32 %v610, %v698
        %700 = vmatprep.mubr.f32.mxu0 0.0
        %701 = vmatmul.mubr.f32.gmra.mrb[0].mxu0 %v530
        %v702 = vpop.f32.mrb[0].mxu0
        %v703 = vadd.f32 %v614, %v702
        %v704 = vpop.f32.mrb[0].mxu0
        %v705 = vadd.f32 %v616, %v704
        %706 = vmatprep.mubr.f32.mxu0 0.0
        %707 = vmatmul.mubr.f32.gmra.mrb[0].mxu0 %v533
        %v708 = vpop.f32.mrb[0].mxu0
        %v709 = vadd.f32 %v620, %v708
        %v710 = vpop.f32.mrb[0].mxu0
        %v711 = vadd.f32 %v622, %v710
        %712 = vdwg.mxu0
        %713 = vmatprep.subr.mxu0 %v298
        %714 = vmatpush1.msra.mxu0 %v297
        %715 = vmatprep.subr.mxu0 %v303
        %716 = vmatpush1.msra.mxu0 %v302
        %717 = vmatprep.subr.mxu0 %v308
        %718 = vmatpush1.msra.mxu0 %v307
        %719 = vmatprep.subr.mxu0 %v313
        %720 = vmatpush1.msra.mxu0 %v312
        %721 = vmatprep.subr.mxu0 %v318
        %722 = vmatpush1.msra.mxu0 %v317
        %723 = vmatprep.subr.mxu0 %v323
        %724 = vmatpush1.msra.mxu0 %v322
        %725 = vmatprep.subr.mxu0 %v328
        %726 = vmatpush1.msra.mxu0 %v327
        %727 = vmatprep.subr.mxu0 %v333
        %728 = vmatpush1.msra.mxu0 %v332
        %729 = vmatprep.subr.mxu0 %v338
        %730 = vmatpush1.msra.mxu0 %v337
        %731 = vmatprep.subr.mxu0 %v343
        %732 = vmatpush1.msra.mxu0 %v342
        %733 = vmatprep.subr.mxu0 %v348
        %734 = vmatpush1.msra.mxu0 %v347
        %735 = vmatprep.subr.mxu0 %v353
        %736 = vmatpush1.msra.mxu0 %v352
        %737 = vmatprep.subr.mxu0 %v358
        %738 = vmatpush1.msra.mxu0 %v357
        %739 = vmatprep.subr.mxu0 %v363
        %740 = vmatpush1.msra.mxu0 %v362
        %741 = vmatprep.subr.mxu0 %v368
        %742 = vmatpush1.msra.mxu0 %v367
        %743 = vmatprep.subr.mxu0 %v373
        %744 = vmatpush1.msra.mxu0 %v372
        %745 = vmatprep.subr.mxu0 %v378
        %746 = vmatpush1.msra.mxu0 %v377
        %747 = vmatprep.subr.mxu0 %v383
        %748 = vmatpush1.msra.mxu0 %v382
        %749 = vmatprep.subr.mxu0 %v388
        %750 = vmatpush1.msra.mxu0 %v387
        %751 = vmatprep.subr.mxu0 %v393
        %752 = vmatpush1.msra.mxu0 %v392
        %753 = vmatprep.subr.mxu0 %v398
        %754 = vmatpush1.msra.mxu0 %v397
        %755 = vmatprep.subr.mxu0 %v403
        %756 = vmatpush1.msra.mxu0 %v402
        %757 = vmatprep.subr.mxu0 %v408
        %758 = vmatpush1.msra.mxu0 %v407
        %759 = vmatprep.subr.mxu0 %v413
        %760 = vmatpush1.msra.mxu0 %v412
        %761 = vmatprep.subr.mxu0 %v418
        %762 = vmatpush1.msra.mxu0 %v417
        %763 = vmatprep.subr.mxu0 %v423
        %764 = vmatpush1.msra.mxu0 %v422
        %765 = vmatprep.subr.mxu0 %v428
        %766 = vmatpush1.msra.mxu0 %v427
        %767 = vmatprep.subr.mxu0 %v433
        %768 = vmatpush1.msra.mxu0 %v432
        %769 = vmatprep.subr.mxu0 %v438
        %770 = vmatpush1.msra.mxu0 %v437
        %771 = vmatprep.subr.mxu0 %v443
        %772 = vmatpush1.msra.mxu0 %v442
        %773 = vmatprep.subr.mxu0 %v448
        %774 = vmatpush1.msra.mxu0 %v447
        %775 = vmatprep.subr.mxu0 %v453
        %776 = vmatpush1.msra.mxu0 %v452
        %777 = vmatprep.mubr.f32.mxu0 %v284
        %778 = vmatmul.mubr.f32.gmra.mrb[0].mxu0 %v283
        %v779 = vpop.f32.mrb[0].mxu0
        %v780 = vadd.f32 %v508, %v779
        %v781 = vpop.f32.mrb[0].mxu0
        %v782 = vadd.f32 %v512, %v781
        %783 = vmatprep.mubr.f32.mxu0 %v287
        %784 = vmatmul.mubr.f32.gmra.mrb[0].mxu0 %v286
        %v785 = vpop.f32.mrb[0].mxu0
        %v786 = vadd.f32 %v508, %v785
        %v787 = vpop.f32.mrb[0].mxu0
        %v788 = vadd.f32 %v512, %v787
        %789 = vmatprep.mubr.f32.mxu0 %v290
        %790 = vmatmul.mubr.f32.gmra.mrb[0].mxu0 %v289
        %v791 = vpop.f32.mrb[0].mxu0
        %v792 = vadd.f32 %v508, %v791
        %v793 = vpop.f32.mrb[0].mxu0
        %v794 = vadd.f32 %v512, %v793
        %795 = vmatprep.mubr.f32.mxu0 %v293
        %796 = vmatmul.mubr.f32.gmra.mrb[0].mxu0 %v292
        %v797 = vpop.f32.mrb[0].mxu0
        %v798 = vadd.f32 %v508, %v797
        %v799 = vpop.f32.mrb[0].mxu0
        %v800 = vadd.f32 %v512, %v799
        %801 = vdwg.mxu0
        %802 = vmatprep.subr.mxu0 %v458
        %803 = vmatpush1.msra.mxu0 %v457
        %804 = vmatprep.subr.mxu0 %v463
        %805 = vmatpush1.msra.mxu0 %v462
        %806 = vmatprep.subr.mxu0 %v468
        %807 = vmatpush1.msra.mxu0 %v467
        %808 = vmatprep.subr.mxu0 %v473
        %809 = vmatpush1.msra.mxu0 %v472
        %810 = vmatprep.subr.mxu0 %v478
        %811 = vmatpush1.msra.mxu0 %v477
        %812 = vmatprep.subr.mxu0 %v483
        %813 = vmatpush1.msra.mxu0 %v482
        %814 = vmatprep.subr.mxu0 %v488
        %815 = vmatpush1.msra.mxu0 %v487
        %816 = vmatprep.subr.mxu0 %v493
        %817 = vmatpush1.msra.mxu0 %v492
        %818 = vmatprep.subr.mxu0 0.0
        %819 = vmatpush1.msra.mxu0 0.0
        %820 = vmatprep.subr.mxu0 0.0
        %821 = vmatpush1.msra.mxu0 0.0
        %822 = vmatprep.subr.mxu0 0.0
        %823 = vmatpush1.msra.mxu0 0.0
        %824 = vmatprep.subr.mxu0 0.0
        %825 = vmatpush1.msra.mxu0 0.0
        %826 = vmatprep.subr.mxu0 0.0
        %827 = vmatpush1.msra.mxu0 0.0
        %828 = vmatprep.subr.mxu0 0.0
        %829 = vmatpush1.msra.mxu0 0.0
        %830 = vmatprep.subr.mxu0 0.0
        %831 = vmatpush1.msra.mxu0 0.0
        %832 = vmatprep.subr.mxu0 0.0
        %833 = vmatpush1.msra.mxu0 0.0
        %834 = vmatprep.subr.mxu0 0.0
        %835 = vmatpush1.msra.mxu0 0.0
        %836 = vmatprep.subr.mxu0 0.0
        %837 = vmatpush1.msra.mxu0 0.0
        %838 = vmatprep.subr.mxu0 0.0
        %839 = vmatpush1.msra.mxu0 0.0
        %840 = vmatprep.subr.mxu0 0.0
        %841 = vmatpush1.msra.mxu0 0.0
        %842 = vmatprep.subr.mxu0 0.0
        %843 = vmatpush1.msra.mxu0 0.0
        %844 = vmatprep.subr.mxu0 0.0
        %845 = vmatpush1.msra.mxu0 0.0
        %846 = vmatprep.subr.mxu0 0.0
        %847 = vmatpush1.msra.mxu0 0.0
        %848 = vmatprep.subr.mxu0 0.0
        %849 = vmatpush1.msra.mxu0 0.0
        %850 = vmatprep.subr.mxu0 0.0
        %851 = vmatpush1.msra.mxu0 0.0
        %852 = vmatprep.subr.mxu0 0.0
        %853 = vmatpush1.msra.mxu0 0.0
        %854 = vmatprep.subr.mxu0 0.0
        %855 = vmatpush1.msra.mxu0 0.0
        %856 = vmatprep.subr.mxu0 0.0
        %857 = vmatpush1.msra.mxu0 0.0
        %858 = vmatprep.subr.mxu0 0.0
        %859 = vmatpush1.msra.mxu0 0.0
        %860 = vmatprep.subr.mxu0 0.0
        %861 = vmatpush1.msra.mxu0 0.0
        %862 = vmatprep.subr.mxu0 0.0
        %863 = vmatpush1.msra.mxu0 0.0
        %864 = vmatprep.subr.mxu0 0.0
        %865 = vmatpush1.msra.mxu0 0.0
        %866 = vmatprep.mubr.f32.mxu0 0.0
        %867 = vmatmul.mubr.f32.gmra.mrb[0].mxu0 %v524
        %v868 = vpop.f32.mrb[0].mxu0
        %v869 = vadd.f32 %v780, %v868
        %v870 = vpop.f32.mrb[0].mxu0
        %v871 = vadd.f32 %v782, %v870
        %872 = vmatprep.mubr.f32.mxu0 0.0
        %873 = vmatmul.mubr.f32.gmra.mrb[0].mxu0 %v527
        %v874 = vpop.f32.mrb[0].mxu0
        %v875 = vadd.f32 %v786, %v874
        %v876 = vpop.f32.mrb[0].mxu0
        %v877 = vadd.f32 %v788, %v876
        %878 = vmatprep.mubr.f32.mxu0 0.0
        %879 = vmatmul.mubr.f32.gmra.mrb[0].mxu0 %v530
        %v880 = vpop.f32.mrb[0].mxu0
        %v881 = vadd.f32 %v792, %v880
        %v882 = vpop.f32.mrb[0].mxu0
        %v883 = vadd.f32 %v794, %v882
        %884 = vmatprep.mubr.f32.mxu0 0.0
        %885 = vmatmul.mubr.f32.gmra.mrb[0].mxu0 %v533
        %v886 = vpop.f32.mrb[0].mxu0
        %v887 = vadd.f32 %v798, %v886
        %v888 = vpop.f32.mrb[0].mxu0
        %v889 = vadd.f32 %v800, %v888
        %890 = vdwg.mxu0
        %891 = vmatprep.subr.mxu0 0.0
        %892 = vmatpush1.msra.mxu0 %v299
        %893 = vmatprep.subr.mxu0 0.0
        %894 = vmatpush1.msra.mxu0 %v304
        %895 = vmatprep.subr.mxu0 0.0
        %896 = vmatpush1.msra.mxu0 %v309
        %897 = vmatprep.subr.mxu0 0.0
        %898 = vmatpush1.msra.mxu0 %v314
        %899 = vmatprep.subr.mxu0 0.0
        %900 = vmatpush1.msra.mxu0 %v319
        %901 = vmatprep.subr.mxu0 0.0
        %902 = vmatpush1.msra.mxu0 %v324
        %903 = vmatprep.subr.mxu0 0.0
        %904 = vmatpush1.msra.mxu0 %v329
        %905 = vmatprep.subr.mxu0 0.0
        %906 = vmatpush1.msra.mxu0 %v334
        %907 = vmatprep.subr.mxu0 0.0
        %908 = vmatpush1.msra.mxu0 %v339
        %909 = vmatprep.subr.mxu0 0.0
        %910 = vmatpush1.msra.mxu0 %v344
        %911 = vmatprep.subr.mxu0 0.0
        %912 = vmatpush1.msra.mxu0 %v349
        %913 = vmatprep.subr.mxu0 0.0
        %914 = vmatpush1.msra.mxu0 %v354
        %915 = vmatprep.subr.mxu0 0.0
        %916 = vmatpush1.msra.mxu0 %v359
        %917 = vmatprep.subr.mxu0 0.0
        %918 = vmatpush1.msra.mxu0 %v364
        %919 = vmatprep.subr.mxu0 0.0
        %920 = vmatpush1.msra.mxu0 %v369
        %921 = vmatprep.subr.mxu0 0.0
        %922 = vmatpush1.msra.mxu0 %v374
        %923 = vmatprep.subr.mxu0 0.0
        %924 = vmatpush1.msra.mxu0 %v379
        %925 = vmatprep.subr.mxu0 0.0
        %926 = vmatpush1.msra.mxu0 %v384
        %927 = vmatprep.subr.mxu0 0.0
        %928 = vmatpush1.msra.mxu0 %v389
        %929 = vmatprep.subr.mxu0 0.0
        %930 = vmatpush1.msra.mxu0 %v394
        %931 = vmatprep.subr.mxu0 0.0
        %932 = vmatpush1.msra.mxu0 %v399
        %933 = vmatprep.subr.mxu0 0.0
        %934 = vmatpush1.msra.mxu0 %v404
        %935 = vmatprep.subr.mxu0 0.0
        %936 = vmatpush1.msra.mxu0 %v409
        %937 = vmatprep.subr.mxu0 0.0
        %938 = vmatpush1.msra.mxu0 %v414
        %939 = vmatprep.subr.mxu0 0.0
        %940 = vmatpush1.msra.mxu0 %v419
        %941 = vmatprep.subr.mxu0 0.0
        %942 = vmatpush1.msra.mxu0 %v424
        %943 = vmatprep.subr.mxu0 0.0
        %944 = vmatpush1.msra.mxu0 %v429
        %945 = vmatprep.subr.mxu0 0.0
        %946 = vmatpush1.msra.mxu0 %v434
        %947 = vmatprep.subr.mxu0 0.0
        %948 = vmatpush1.msra.mxu0 %v439
        %949 = vmatprep.subr.mxu0 0.0
        %950 = vmatpush1.msra.mxu0 %v444
        %951 = vmatprep.subr.mxu0 0.0
        %952 = vmatpush1.msra.mxu0 %v449
        %953 = vmatprep.subr.mxu0 0.0
        %954 = vmatpush1.msra.mxu0 %v454
        %955 = vmatprep.mubr.f32.mxu0 %v284
        %956 = vmatmul.mubr.f32.gmra.mrb[0].mxu0 %v283
        %v957 = vpop.f32.mrb[0].mxu0
        %v958 = vadd.f32 %v516, %v957
        %v959 = vpop.f32.mrb[0].mxu0
        %960 = vmatprep.mubr.f32.mxu0 %v287
        %961 = vmatmul.mubr.f32.gmra.mrb[0].mxu0 %v286
        %v962 = vpop.f32.mrb[0].mxu0
        %v963 = vadd.f32 %v516, %v962
        %v964 = vpop.f32.mrb[0].mxu0
        %965 = vmatprep.mubr.f32.mxu0 %v290
        %966 = vmatmul.mubr.f32.gmra.mrb[0].mxu0 %v289
        %v967 = vpop.f32.mrb[0].mxu0
        %v968 = vadd.f32 %v516, %v967
        %v969 = vpop.f32.mrb[0].mxu0
        %970 = vmatprep.mubr.f32.mxu0 %v293
        %971 = vmatmul.mubr.f32.gmra.mrb[0].mxu0 %v292
        %v972 = vpop.f32.mrb[0].mxu0
        %v973 = vadd.f32 %v516, %v972
        %v974 = vpop.f32.mrb[0].mxu0
        %975 = vdwg.mxu0
        %976 = vmatprep.subr.mxu0 0.0
        %977 = vmatpush1.msra.mxu0 %v459
        %978 = vmatprep.subr.mxu0 0.0
        %979 = vmatpush1.msra.mxu0 %v464
        %980 = vmatprep.subr.mxu0 0.0
        %981 = vmatpush1.msra.mxu0 %v469
        %982 = vmatprep.subr.mxu0 0.0
        %983 = vmatpush1.msra.mxu0 %v474
        %984 = vmatprep.subr.mxu0 0.0
        %985 = vmatpush1.msra.mxu0 %v479
        %986 = vmatprep.subr.mxu0 0.0
        %987 = vmatpush1.msra.mxu0 %v484
        %988 = vmatprep.subr.mxu0 0.0
        %989 = vmatpush1.msra.mxu0 %v489
        %990 = vmatprep.subr.mxu0 0.0
        %991 = vmatpush1.msra.mxu0 %v494
        %992 = vmatprep.subr.mxu0 0.0
        %993 = vmatpush1.msra.mxu0 0.0
        %994 = vmatprep.subr.mxu0 0.0
        %995 = vmatpush1.msra.mxu0 0.0
        %996 = vmatprep.subr.mxu0 0.0
        %997 = vmatpush1.msra.mxu0 0.0
        %998 = vmatprep.subr.mxu0 0.0
        %999 = vmatpush1.msra.mxu0 0.0
        %1000 = vmatprep.subr.mxu0 0.0
        %1001 = vmatpush1.msra.mxu0 0.0
        %1002 = vmatprep.subr.mxu0 0.0
        %1003 = vmatpush1.msra.mxu0 0.0
        %1004 = vmatprep.subr.mxu0 0.0
        %1005 = vmatpush1.msra.mxu0 0.0
        %1006 = vmatprep.subr.mxu0 0.0
        %1007 = vmatpush1.msra.mxu0 0.0
        %1008 = vmatprep.subr.mxu0 0.0
        %1009 = vmatpush1.msra.mxu0 0.0
        %1010 = vmatprep.subr.mxu0 0.0
        %1011 = vmatpush1.msra.mxu0 0.0
        %1012 = vmatprep.subr.mxu0 0.0
        %1013 = vmatpush1.msra.mxu0 0.0
        %1014 = vmatprep.subr.mxu0 0.0
        %1015 = vmatpush1.msra.mxu0 0.0
        %1016 = vmatprep.subr.mxu0 0.0
        %1017 = vmatpush1.msra.mxu0 0.0
        %1018 = vmatprep.subr.mxu0 0.0
        %1019 = vmatpush1.msra.mxu0 0.0
        %1020 = vmatprep.subr.mxu0 0.0
        %1021 = vmatpush1.msra.mxu0 0.0
        %1022 = vmatprep.subr.mxu0 0.0
        %1023 = vmatpush1.msra.mxu0 0.0
        %1024 = vmatprep.subr.mxu0 0.0
        %1025 = vmatpush1.msra.mxu0 0.0
        %1026 = vmatprep.subr.mxu0 0.0
        %1027 = vmatpush1.msra.mxu0 0.0
        %1028 = vmatprep.subr.mxu0 0.0
        %1029 = vmatpush1.msra.mxu0 0.0
        %1030 = vmatprep.subr.mxu0 0.0
        %1031 = vmatpush1.msra.mxu0 0.0
        %1032 = vmatprep.subr.mxu0 0.0
        %1033 = vmatpush1.msra.mxu0 0.0
        %1034 = vmatprep.subr.mxu0 0.0
        %1035 = vmatpush1.msra.mxu0 0.0
        %1036 = vmatprep.subr.mxu0 0.0
        %1037 = vmatpush1.msra.mxu0 0.0
        %1038 = vmatprep.subr.mxu0 0.0
        %1039 = vmatpush1.msra.mxu0 0.0
        %1040 = vmatprep.mubr.f32.mxu0 0.0
        %1041 = vmatmul.mubr.f32.gmra.mrb[0].mxu0 %v524
        %v1042 = vpop.f32.mrb[0].mxu0
        %v1043 = vadd.f32 %v958, %v1042
        %v1044 = vpop.f32.mrb[0].mxu0
        %1045 = vmatprep.mubr.f32.mxu0 0.0
        %1046 = vmatmul.mubr.f32.gmra.mrb[0].mxu0 %v527
        %v1047 = vpop.f32.mrb[0].mxu0
        %v1048 = vadd.f32 %v963, %v1047
        %v1049 = vpop.f32.mrb[0].mxu0
        %1050 = vmatprep.mubr.f32.mxu0 0.0
        %1051 = vmatmul.mubr.f32.gmra.mrb[0].mxu0 %v530
        %v1052 = vpop.f32.mrb[0].mxu0
        %v1053 = vadd.f32 %v968, %v1052
        %v1054 = vpop.f32.mrb[0].mxu0
        %1055 = vmatprep.mubr.f32.mxu0 0.0
        %1056 = vmatmul.mubr.f32.gmra.mrb[0].mxu0 %v533
        %v1057 = vpop.f32.mrb[0].mxu0
        %v1058 = vadd.f32 %v973, %v1057
        %v1059 = vpop.f32.mrb[0].mxu0
        %1060 = vdwg.mxu0
        %v1061 = vmax.f32 %v691, 0.0
        %v1062 = vmax.f32 %v693, 0.0
        %v1063 = vmax.f32 %v869, 0.0
        %v1064 = vmax.f32 %v871, 0.0
        %v1065 = vmax.f32 %v1043, 0.0
        %v1066 = vmax.f32 %v697, 0.0
        %v1067 = vmax.f32 %v699, 0.0
        %v1068 = vmax.f32 %v875, 0.0
        %v1069 = vmax.f32 %v877, 0.0
        %v1070 = vmax.f32 %v1048, 0.0
        %v1071 = vmax.f32 %v703, 0.0
        %v1072 = vmax.f32 %v705, 0.0
        %v1073 = vmax.f32 %v881, 0.0
        %v1074 = vmax.f32 %v883, 0.0
        %v1075 = vmax.f32 %v1053, 0.0
        %v1076 = vmax.f32 %v709, 0.0
        %v1077 = vmax.f32 %v711, 0.0
        %v1078 = vmax.f32 %v887, 0.0
        %v1079 = vmax.f32 %v889, 0.0
        %v1080 = vmax.f32 %v1058, 0.0
        %v1081 = vld [vmem:[%s2] sm:$0xff]
        %v1082 = vld [vmem:[%s2 + $0x8] sm:$0xff]
        %v1083 = vld [vmem:[%s2 + $0x10] sm:$0xff]
        %v1084 = vld [vmem:[%s2 + $0x18] sm:$0xff]
        %v1085 = vld [vmem:[%s2 + $0x20] sm:$0xff]
        %v1086 = vld [vmem:[%s2 + $0x28] sm:$0xff]
        %v1087 = vld [vmem:[%s2 + $0x30] sm:$0xff]
        %v1088 = vld [vmem:[%s2 + $0x38] sm:$0xff]
        %v1089 = vld [vmem:[%s2 + $0x40] sm:$0xff]
        %v1090 = vld [vmem:[%s2 + $0x48] sm:$0xff]
        %v1091 = vld [vmem:[%s2 + $0x50] sm:$0xff]
        %v1092 = vld [vmem:[%s2 + $0x58] sm:$0xff]
        %v1093 = vld [vmem:[%s2 + $0x60] sm:$0xff]
        %v1094 = vld [vmem:[%s2 + $0x68] sm:$0xff]
        %v1095 = vld [vmem:[%s2 + $0x70] sm:$0xff]
        %v1096 = vld [vmem:[%s2 + $0x78] sm:$0xff]
        %v1097 = vld [vmem:[%s2 + $0x80] sm:$0xff]
        %v1098 = vld [vmem:[%s2 + $0x88] sm:$0xff]
        %v1099 = vld [vmem:[%s2 + $0x90] sm:$0xff]
        %v1100 = vld [vmem:[%s2 + $0x98] sm:$0xff]
        %v1101 = vld [vmem:[%s2 + $0xa0] sm:$0xff]
        %v1102 = vld [vmem:[%s2 + $0xa8] sm:$0xff]
        %v1103 = vld [vmem:[%s2 + $0xb0] sm:$0xff]
        %v1104 = vld [vmem:[%s2 + $0xb8] sm:$0xff]
        %v1105 = vld [vmem:[%s2 + $0xc0] sm:$0xff]
        %v1106 = vld [vmem:[%s2 + $0xc8] sm:$0xff]
        %v1107 = vld [vmem:[%s2 + $0xd0] sm:$0xff]
        %v1108 = vld [vmem:[%s2 + $0xd8] sm:$0xff]
        %v1109 = vld [vmem:[%s2 + $0xe0] sm:$0xff]
        %v1110 = vld [vmem:[%s2 + $0xe8] sm:$0xff]
        %v1111 = vld [vmem:[%s2 + $0xf0] sm:$0xff]
        %v1112 = vld [vmem:[%s2 + $0xf8] sm:$0xff]
        %v1113 = vld [vmem:[%s2 + $0x100] sm:$0xff]
        %v1114 = vld [vmem:[%s2 + $0x108] sm:$0xff]
        %v1115 = vld [vmem:[%s2 + $0x110] sm:$0xff]
        %v1116 = vld [vmem:[%s2 + $0x118] sm:$0xff]
        %v1117 = vld [vmem:[%s2 + $0x120] sm:$0xff]
        %v1118 = vld [vmem:[%s2 + $0x128] sm:$0xff]
        %v1119 = vld [vmem:[%s2 + $0x130] sm:$0xff]
        %v1120 = vld [vmem:[%s2 + $0x138] sm:$0xff]
        %v1121 = vld [vmem:[%s2 + $0x140] sm:$0xff]
        %v1122 = vld [vmem:[%s2 + $0x148] sm:$0xff]
        %v1123 = vld [vmem:[%s2 + $0x150] sm:$0xff]
        %v1124 = vld [vmem:[%s2 + $0x158] sm:$0xff]
        %v1125 = vld [vmem:[%s2 + $0x160] sm:$0xff]
        %v1126 = vld [vmem:[%s2 + $0x168] sm:$0xff]
        %v1127 = vld [vmem:[%s2 + $0x170] sm:$0xff]
        %v1128 = vld [vmem:[%s2 + $0x178] sm:$0xff]
        %v1129 = vld [vmem:[%s2 + $0x180] sm:$0xff]
        %v1130 = vld [vmem:[%s2 + $0x188] sm:$0xff]
        %v1131 = vld [vmem:[%s2 + $0x190] sm:$0xff]
        %v1132 = vld [vmem:[%s2 + $0x198] sm:$0xff]
        %v1133 = vld [vmem:[%s2 + $0x1a0] sm:$0xff]
        %v1134 = vld [vmem:[%s2 + $0x1a8] sm:$0xff]
        %v1135 = vld [vmem:[%s2 + $0x1b0] sm:$0xff]
        %v1136 = vld [vmem:[%s2 + $0x1b8] sm:$0xff]
        %v1137 = vld [vmem:[%s2 + $0x1c0] sm:$0xff]
        %v1138 = vld [vmem:[%s2 + $0x1c8] sm:$0xff]
        %v1139 = vld [vmem:[%s2 + $0x1d0] sm:$0xff]
        %v1140 = vld [vmem:[%s2 + $0x1d8] sm:$0xff]
        %v1141 = vld [vmem:[%s2 + $0x1e0] sm:$0xff]
        %v1142 = vld [vmem:[%s2 + $0x1e8] sm:$0xff]
        %v1143 = vld [vmem:[%s2 + $0x1f0] sm:$0xff]
        %v1144 = vld [vmem:[%s2 + $0x1f8] sm:$0xff]
        %v1145 = vld [vmem:[%s2 + $0x200] sm:$0xff]
        %v1146 = vld [vmem:[%s2 + $0x208] sm:$0xff]
        %v1147 = vld [vmem:[%s2 + $0x210] sm:$0xff]
        %v1148 = vld [vmem:[%s2 + $0x218] sm:$0xff]
        %v1149 = vld [vmem:[%s2 + $0x220] sm:$0xff]
        %v1150 = vld [vmem:[%s2 + $0x228] sm:$0xff]
        %v1151 = vld [vmem:[%s2 + $0x230] sm:$0xff]
        %v1152 = vld [vmem:[%s2 + $0x238] sm:$0xff]
        %v1153 = vld [vmem:[%s2 + $0x240] sm:$0xff]
        %v1154 = vld [vmem:[%s2 + $0x248] sm:$0xff]
        %v1155 = vld [vmem:[%s2 + $0x250] sm:$0xff]
        %v1156 = vld [vmem:[%s2 + $0x258] sm:$0xff]
        %v1157 = vld [vmem:[%s2 + $0x260] sm:$0xff]
        %v1158 = vld [vmem:[%s2 + $0x268] sm:$0xff]
        %v1159 = vld [vmem:[%s2 + $0x270] sm:$0xff]
        %v1160 = vld [vmem:[%s2 + $0x278] sm:$0xff]
        %v1161 = vld [vmem:[%s2 + $0x280] sm:$0xff]
        %v1162 = vld [vmem:[%s2 + $0x288] sm:$0xff]
        %v1163 = vld [vmem:[%s2 + $0x290] sm:$0xff]
        %v1164 = vld [vmem:[%s2 + $0x298] sm:$0xff]
        %v1165 = vld [vmem:[%s2 + $0x2a0] sm:$0xff]
        %v1166 = vld [vmem:[%s2 + $0x2a8] sm:$0xff]
        %v1167 = vld [vmem:[%s2 + $0x2b0] sm:$0xff]
        %v1168 = vld [vmem:[%s2 + $0x2b8] sm:$0xff]
        %v1169 = vld [vmem:[%s2 + $0x2c0] sm:$0xff]
        %v1170 = vld [vmem:[%s2 + $0x2c8] sm:$0xff]
        %v1171 = vld [vmem:[%s2 + $0x2d0] sm:$0xff]
        %v1172 = vld [vmem:[%s2 + $0x2d8] sm:$0xff]
        %v1173 = vld [vmem:[%s2 + $0x2e0] sm:$0xff]
        %v1174 = vld [vmem:[%s2 + $0x2e8] sm:$0xff]
        %v1175 = vld [vmem:[%s2 + $0x2f0] sm:$0xff]
        %v1176 = vld [vmem:[%s2 + $0x2f8] sm:$0xff]
        %v1177 = vld [vmem:[%s2 + $0x300] sm:$0xff]
        %v1178 = vld [vmem:[%s2 + $0x308] sm:$0xff]
        %v1179 = vld [vmem:[%s2 + $0x310] sm:$0xff]
        %v1180 = vld [vmem:[%s2 + $0x318] sm:$0xff]
        %v1181 = vld [vmem:[%s2 + $0x320] sm:$0xff]
        %v1182 = vld [vmem:[%s2 + $0x328] sm:$0xff]
        %v1183 = vld [vmem:[%s2 + $0x330] sm:$0xff]
        %v1184 = vld [vmem:[%s2 + $0x338] sm:$0xff]
        %v1185 = vld [vmem:[%s2 + $0x340] sm:$0xff]
        %v1186 = vld [vmem:[%s2 + $0x348] sm:$0xff]
        %v1187 = vld [vmem:[%s2 + $0x350] sm:$0xff]
        %v1188 = vld [vmem:[%s2 + $0x358] sm:$0xff]
        %v1189 = vld [vmem:[%s2 + $0x360] sm:$0xff]
        %v1190 = vld [vmem:[%s2 + $0x368] sm:$0xff]
        %v1191 = vld [vmem:[%s2 + $0x370] sm:$0xff]
        %v1192 = vld [vmem:[%s2 + $0x378] sm:$0xff]
        %v1193 = vld [vmem:[%s2 + $0x380] sm:$0xff]
        %v1194 = vld [vmem:[%s2 + $0x388] sm:$0xff]
        %v1195 = vld [vmem:[%s2 + $0x390] sm:$0xff]
        %v1196 = vld [vmem:[%s2 + $0x398] sm:$0xff]
        %v1197 = vld [vmem:[%s2 + $0x3a0] sm:$0xff]
        %v1198 = vld [vmem:[%s2 + $0x3a8] sm:$0xff]
        %v1199 = vld [vmem:[%s2 + $0x3b0] sm:$0xff]
        %v1200 = vld [vmem:[%s2 + $0x3b8] sm:$0xff]
        %v1201 = vld [vmem:[%s2 + $0x3c0] sm:$0xff]
        %v1202 = vld [vmem:[%s2 + $0x3c8] sm:$0xff]
        %v1203 = vld [vmem:[%s2 + $0x3d0] sm:$0xff]
        %v1204 = vld [vmem:[%s2 + $0x3d8] sm:$0xff]
        %v1205 = vld [vmem:[%s2 + $0x3e0] sm:$0xff]
        %v1206 = vld [vmem:[%s2 + $0x3e8] sm:$0xff]
        %v1207 = vld [vmem:[%s2 + $0x3f0] sm:$0xff]
        %v1208 = vld [vmem:[%s2 + $0x3f8] sm:$0xff]
        %v1209 = vld [vmem:[%s2 + $0x400] sm:$0xff]
        %v1210 = vld [vmem:[%s2 + $0x408] sm:$0xff]
        %v1211 = vld [vmem:[%s2 + $0x410] sm:$0xff]
        %v1212 = vld [vmem:[%s2 + $0x418] sm:$0xff]
        %v1213 = vld [vmem:[%s2 + $0x420] sm:$0xff]
        %v1214 = vld [vmem:[%s2 + $0x428] sm:$0xff]
        %v1215 = vld [vmem:[%s2 + $0x430] sm:$0xff]
        %v1216 = vld [vmem:[%s2 + $0x438] sm:$0xff]
        %v1217 = vld [vmem:[%s2 + $0x440] sm:$0xff]
        %v1218 = vld [vmem:[%s2 + $0x448] sm:$0xff]
        %v1219 = vld [vmem:[%s2 + $0x450] sm:$0xff]
        %v1220 = vld [vmem:[%s2 + $0x458] sm:$0xff]
        %v1221 = vld [vmem:[%s2 + $0x460] sm:$0xff]
        %v1222 = vld [vmem:[%s2 + $0x468] sm:$0xff]
        %v1223 = vld [vmem:[%s2 + $0x470] sm:$0xff]
        %v1224 = vld [vmem:[%s2 + $0x478] sm:$0xff]
        %v1225 = vld [vmem:[%s2 + $0x480] sm:$0xff]
        %v1226 = vld [vmem:[%s2 + $0x488] sm:$0xff]
        %v1227 = vld [vmem:[%s2 + $0x490] sm:$0xff]
        %v1228 = vld [vmem:[%s2 + $0x498] sm:$0xff]
        %v1229 = vld [vmem:[%s2 + $0x4a0] sm:$0xff]
        %v1230 = vld [vmem:[%s2 + $0x4a8] sm:$0xff]
        %v1231 = vld [vmem:[%s2 + $0x4b0] sm:$0xff]
        %v1232 = vld [vmem:[%s2 + $0x4b8] sm:$0xff]
        %v1233 = vld [vmem:[%s2 + $0x4c0] sm:$0xff]
        %v1234 = vld [vmem:[%s2 + $0x4c8] sm:$0xff]
        %v1235 = vld [vmem:[%s2 + $0x4d0] sm:$0xff]
        %v1236 = vld [vmem:[%s2 + $0x4d8] sm:$0xff]
        %v1237 = vld [vmem:[%s2 + $0x4e0] sm:$0xff]
        %v1238 = vld [vmem:[%s2 + $0x4e8] sm:$0xff]
        %v1239 = vld [vmem:[%s2 + $0x4f0] sm:$0xff]
        %v1240 = vld [vmem:[%s2 + $0x4f8] sm:$0xff]
        %v1241 = vld [vmem:[%s2 + $0x500] sm:$0xff]
        %v1242 = vld [vmem:[%s2 + $0x508] sm:$0xff]
        %v1243 = vld [vmem:[%s2 + $0x510] sm:$0xff]
        %v1244 = vld [vmem:[%s2 + $0x518] sm:$0xff]
        %v1245 = vld [vmem:[%s2 + $0x520] sm:$0xff]
        %v1246 = vld [vmem:[%s2 + $0x528] sm:$0xff]
        %v1247 = vld [vmem:[%s2 + $0x530] sm:$0xff]
        %v1248 = vld [vmem:[%s2 + $0x538] sm:$0xff]
        %v1249 = vld [vmem:[%s2 + $0x540] sm:$0xff]
        %v1250 = vld [vmem:[%s2 + $0x548] sm:$0xff]
        %v1251 = vld [vmem:[%s2 + $0x550] sm:$0xff]
        %v1252 = vld [vmem:[%s2 + $0x558] sm:$0xff]
        %v1253 = vld [vmem:[%s2 + $0x560] sm:$0xff]
        %v1254 = vld [vmem:[%s2 + $0x568] sm:$0xff]
        %v1255 = vld [vmem:[%s2 + $0x570] sm:$0xff]
        %v1256 = vld [vmem:[%s2 + $0x578] sm:$0xff]
        %v1257 = vld [vmem:[%s2 + $0x580] sm:$0xff]
        %v1258 = vld [vmem:[%s2 + $0x588] sm:$0xff]
        %v1259 = vld [vmem:[%s2 + $0x590] sm:$0xff]
        %v1260 = vld [vmem:[%s2 + $0x598] sm:$0xff]
        %v1261 = vld [vmem:[%s2 + $0x5a0] sm:$0xff]
        %v1262 = vld [vmem:[%s2 + $0x5a8] sm:$0xff]
        %v1263 = vld [vmem:[%s2 + $0x5b0] sm:$0xff]
        %v1264 = vld [vmem:[%s2 + $0x5b8] sm:$0xff]
        %v1265 = vld [vmem:[%s2 + $0x5c0] sm:$0xff]
        %v1266 = vld [vmem:[%s2 + $0x5c8] sm:$0xff]
        %v1267 = vld [vmem:[%s2 + $0x5d0] sm:$0xff]
        %v1268 = vld [vmem:[%s2 + $0x5d8] sm:$0xff]
        %v1269 = vld [vmem:[%s2 + $0x5e0] sm:$0xff]
        %v1270 = vld [vmem:[%s2 + $0x5e8] sm:$0xff]
        %v1271 = vld [vmem:[%s2 + $0x5f0] sm:$0xff]
        %v1272 = vld [vmem:[%s2 + $0x5f8] sm:$0xff]
        %v1273 = vld [vmem:[%s2 + $0x600] sm:$0xff]
        %v1274 = vld [vmem:[%s2 + $0x608] sm:$0xff]
        %v1275 = vld [vmem:[%s2 + $0x610] sm:$0xff]
        %v1276 = vld [vmem:[%s2 + $0x618] sm:$0xff]
        %v1277 = vld [vmem:[%s2 + $0x620] sm:$0xff]
        %v1278 = vld [vmem:[%s2 + $0x628] sm:$0xff]
        %v1279 = vld [vmem:[%s2 + $0x630] sm:$0xff]
        %v1280 = vld [vmem:[%s2 + $0x638] sm:$0xff]
        %v1281 = vld [vmem:[%s2 + $0x640] sm:$0xff]
        %v1282 = vld [vmem:[%s2 + $0x648] sm:$0xff]
        %v1283 = vld [vmem:[%s2 + $0x650] sm:$0xff]
        %v1284 = vld [vmem:[%s2 + $0x658] sm:$0xff]
        %v1285 = vld [vmem:[%s2 + $0x660] sm:$0xff]
        %v1286 = vld [vmem:[%s2 + $0x668] sm:$0xff]
        %v1287 = vld [vmem:[%s2 + $0x670] sm:$0xff]
        %v1288 = vld [vmem:[%s2 + $0x678] sm:$0xff]
        %v1289 = vld [vmem:[%s2 + $0x680] sm:$0xff]
        %v1290 = vld [vmem:[%s2 + $0x688] sm:$0xff]
        %v1291 = vld [vmem:[%s2 + $0x690] sm:$0xff]
        %v1292 = vld [vmem:[%s2 + $0x698] sm:$0xff]
        %v1293 = vld [vmem:[%s2 + $0x6a0] sm:$0xff]
        %v1294 = vld [vmem:[%s2 + $0x6a8] sm:$0xff]
        %v1295 = vld [vmem:[%s2 + $0x6b0] sm:$0xff]
        %v1296 = vld [vmem:[%s2 + $0x6b8] sm:$0xff]
        %v1297 = vld [vmem:[%s2 + $0x6c0] sm:$0xff]
        %v1298 = vld [vmem:[%s2 + $0x6c8] sm:$0xff]
        %v1299 = vld [vmem:[%s2 + $0x6d0] sm:$0xff]
        %v1300 = vld [vmem:[%s2 + $0x6d8] sm:$0xff]
        %v1301 = vld [vmem:[%s2 + $0x6e0] sm:$0xff]
        %v1302 = vld [vmem:[%s2 + $0x6e8] sm:$0xff]
        %v1303 = vld [vmem:[%s2 + $0x6f0] sm:$0xff]
        %v1304 = vld [vmem:[%s2 + $0x6f8] sm:$0xff]
        %v1305 = vld [vmem:[%s2 + $0x700] sm:$0xff]
        %v1306 = vld [vmem:[%s2 + $0x708] sm:$0xff]
        %v1307 = vld [vmem:[%s2 + $0x710] sm:$0xff]
        %v1308 = vld [vmem:[%s2 + $0x718] sm:$0xff]
        %v1309 = vld [vmem:[%s2 + $0x720] sm:$0xff]
        %v1310 = vld [vmem:[%s2 + $0x728] sm:$0xff]
        %v1311 = vld [vmem:[%s2 + $0x730] sm:$0xff]
        %v1312 = vld [vmem:[%s2 + $0x738] sm:$0xff]
        %v1313 = vld [vmem:[%s2 + $0x740] sm:$0xff]
        %v1314 = vld [vmem:[%s2 + $0x748] sm:$0xff]
        %v1315 = vld [vmem:[%s2 + $0x750] sm:$0xff]
        %v1316 = vld [vmem:[%s2 + $0x758] sm:$0xff]
        %v1317 = vld [vmem:[%s2 + $0x760] sm:$0xff]
        %v1318 = vld [vmem:[%s2 + $0x768] sm:$0xff]
        %v1319 = vld [vmem:[%s2 + $0x770] sm:$0xff]
        %v1320 = vld [vmem:[%s2 + $0x778] sm:$0xff]
        %v1321 = vld [vmem:[%s4] sm:$0x7]
        %v1323 = vlaneseq
        %v1324 = vshrl.u32 %v1323, 7
        %v1325 = vsub.s32 0, %v1324
        %v1326 = vrot.slane %v1321, %v1325
        %v1327 = vlaneseq
        %v1328 = vshrl.u32 %v1327, 7
        %v1329 = vsub.s32 1, %v1328
        %v1330 = vrot.slane %v1321, %v1329
        %v1331 = vlaneseq
        %v1332 = vshrl.u32 %v1331, 7
        %v1333 = vsub.s32 2, %v1332
        %v1334 = vrot.slane %v1321, %v1333
        %1338 = vmatprep.subr.mxu0 %v1082
        %1339 = vmatpush1.msra.mxu0 %v1081
        %1340 = vmatprep.subr.mxu0 %v1085
        %1341 = vmatpush1.msra.mxu0 %v1084
        %1342 = vmatprep.subr.mxu0 %v1088
        %1343 = vmatpush1.msra.mxu0 %v1087
        %1344 = vmatprep.subr.mxu0 %v1091
        %1345 = vmatpush1.msra.mxu0 %v1090
        %1346 = vmatprep.subr.mxu0 %v1094
        %1347 = vmatpush1.msra.mxu0 %v1093
        %1348 = vmatprep.subr.mxu0 %v1097
        %1349 = vmatpush1.msra.mxu0 %v1096
        %1350 = vmatprep.subr.mxu0 %v1100
        %1351 = vmatpush1.msra.mxu0 %v1099
        %1352 = vmatprep.subr.mxu0 %v1103
        %1353 = vmatpush1.msra.mxu0 %v1102
        %1354 = vmatprep.subr.mxu0 %v1106
        %1355 = vmatpush1.msra.mxu0 %v1105
        %1356 = vmatprep.subr.mxu0 %v1109
        %1357 = vmatpush1.msra.mxu0 %v1108
        %1358 = vmatprep.subr.mxu0 %v1112
        %1359 = vmatpush1.msra.mxu0 %v1111
        %1360 = vmatprep.subr.mxu0 %v1115
        %1361 = vmatpush1.msra.mxu0 %v1114
        %1362 = vmatprep.subr.mxu0 %v1118
        %1363 = vmatpush1.msra.mxu0 %v1117
        %1364 = vmatprep.subr.mxu0 %v1121
        %1365 = vmatpush1.msra.mxu0 %v1120
        %1366 = vmatprep.subr.mxu0 %v1124
        %1367 = vmatpush1.msra.mxu0 %v1123
        %1368 = vmatprep.subr.mxu0 %v1127
        %1369 = vmatpush1.msra.mxu0 %v1126
        %1370 = vmatprep.subr.mxu0 %v1130
        %1371 = vmatpush1.msra.mxu0 %v1129
        %1372 = vmatprep.subr.mxu0 %v1133
        %1373 = vmatpush1.msra.mxu0 %v1132
        %1374 = vmatprep.subr.mxu0 %v1136
        %1375 = vmatpush1.msra.mxu0 %v1135
        %1376 = vmatprep.subr.mxu0 %v1139
        %1377 = vmatpush1.msra.mxu0 %v1138
        %1378 = vmatprep.subr.mxu0 %v1142
        %1379 = vmatpush1.msra.mxu0 %v1141
        %1380 = vmatprep.subr.mxu0 %v1145
        %1381 = vmatpush1.msra.mxu0 %v1144
        %1382 = vmatprep.subr.mxu0 %v1148
        %1383 = vmatpush1.msra.mxu0 %v1147
        %1384 = vmatprep.subr.mxu0 %v1151
        %1385 = vmatpush1.msra.mxu0 %v1150
        %1386 = vmatprep.subr.mxu0 %v1154
        %1387 = vmatpush1.msra.mxu0 %v1153
        %1388 = vmatprep.subr.mxu0 %v1157
        %1389 = vmatpush1.msra.mxu0 %v1156
        %1390 = vmatprep.subr.mxu0 %v1160
        %1391 = vmatpush1.msra.mxu0 %v1159
        %1392 = vmatprep.subr.mxu0 %v1163
        %1393 = vmatpush1.msra.mxu0 %v1162
        %1394 = vmatprep.subr.mxu0 %v1166
        %1395 = vmatpush1.msra.mxu0 %v1165
        %1396 = vmatprep.subr.mxu0 %v1169
        %1397 = vmatpush1.msra.mxu0 %v1168
        %1398 = vmatprep.subr.mxu0 %v1172
        %1399 = vmatpush1.msra.mxu0 %v1171
        %1400 = vmatprep.subr.mxu0 %v1175
        %1401 = vmatpush1.msra.mxu0 %v1174
        %1402 = vmatprep.mubr.f32.mxu0 %v1062
        %1403 = vmatmul.mubr.f32.gmra.mrb[0].mxu0 %v1061
        %v1404 = vpop.f32.mrb[0].mxu0
        %v1405 = vadd.f32 %v1326, %v1404
        %v1406 = vpop.f32.mrb[0].mxu0
        %v1407 = vadd.f32 %v1330, %v1406
        %1408 = vmatprep.mubr.f32.mxu0 %v1067
        %1409 = vmatmul.mubr.f32.gmra.mrb[0].mxu0 %v1066
        %v1410 = vpop.f32.mrb[0].mxu0
        %v1411 = vadd.f32 %v1326, %v1410
        %v1412 = vpop.f32.mrb[0].mxu0
        %v1413 = vadd.f32 %v1330, %v1412
        %1414 = vmatprep.mubr.f32.mxu0 %v1072
        %1415 = vmatmul.mubr.f32.gmra.mrb[0].mxu0 %v1071
        %v1416 = vpop.f32.mrb[0].mxu0
        %v1417 = vadd.f32 %v1326, %v1416
        %v1418 = vpop.f32.mrb[0].mxu0
        %v1419 = vadd.f32 %v1330, %v1418
        %1420 = vmatprep.mubr.f32.mxu0 %v1077
        %1421 = vmatmul.mubr.f32.gmra.mrb[0].mxu0 %v1076
        %v1422 = vpop.f32.mrb[0].mxu0
        %v1423 = vadd.f32 %v1326, %v1422
        %v1424 = vpop.f32.mrb[0].mxu0
        %v1425 = vadd.f32 %v1330, %v1424
        %1426 = vdwg.mxu0
        %1427 = vmatprep.subr.mxu0 %v1178
        %1428 = vmatpush1.msra.mxu0 %v1177
        %1429 = vmatprep.subr.mxu0 %v1181
        %1430 = vmatpush1.msra.mxu0 %v1180
        %1431 = vmatprep.subr.mxu0 %v1184
        %1432 = vmatpush1.msra.mxu0 %v1183
        %1433 = vmatprep.subr.mxu0 %v1187
        %1434 = vmatpush1.msra.mxu0 %v1186
        %1435 = vmatprep.subr.mxu0 %v1190
        %1436 = vmatpush1.msra.mxu0 %v1189
        %1437 = vmatprep.subr.mxu0 %v1193
        %1438 = vmatpush1.msra.mxu0 %v1192
        %1439 = vmatprep.subr.mxu0 %v1196
        %1440 = vmatpush1.msra.mxu0 %v1195
        %1441 = vmatprep.subr.mxu0 %v1199
        %1442 = vmatpush1.msra.mxu0 %v1198
        %1443 = vmatprep.subr.mxu0 %v1202
        %1444 = vmatpush1.msra.mxu0 %v1201
        %1445 = vmatprep.subr.mxu0 %v1205
        %1446 = vmatpush1.msra.mxu0 %v1204
        %1447 = vmatprep.subr.mxu0 %v1208
        %1448 = vmatpush1.msra.mxu0 %v1207
        %1449 = vmatprep.subr.mxu0 %v1211
        %1450 = vmatpush1.msra.mxu0 %v1210
        %1451 = vmatprep.subr.mxu0 %v1214
        %1452 = vmatpush1.msra.mxu0 %v1213
        %1453 = vmatprep.subr.mxu0 %v1217
        %1454 = vmatpush1.msra.mxu0 %v1216
        %1455 = vmatprep.subr.mxu0 %v1220
        %1456 = vmatpush1.msra.mxu0 %v1219
        %1457 = vmatprep.subr.mxu0 %v1223
        %1458 = vmatpush1.msra.mxu0 %v1222
        %1459 = vmatprep.subr.mxu0 %v1226
        %1460 = vmatpush1.msra.mxu0 %v1225
        %1461 = vmatprep.subr.mxu0 %v1229
        %1462 = vmatpush1.msra.mxu0 %v1228
        %1463 = vmatprep.subr.mxu0 %v1232
        %1464 = vmatpush1.msra.mxu0 %v1231
        %1465 = vmatprep.subr.mxu0 %v1235
        %1466 = vmatpush1.msra.mxu0 %v1234
        %1467 = vmatprep.subr.mxu0 %v1238
        %1468 = vmatpush1.msra.mxu0 %v1237
        %1469 = vmatprep.subr.mxu0 %v1241
        %1470 = vmatpush1.msra.mxu0 %v1240
        %1471 = vmatprep.subr.mxu0 %v1244
        %1472 = vmatpush1.msra.mxu0 %v1243
        %1473 = vmatprep.subr.mxu0 %v1247
        %1474 = vmatpush1.msra.mxu0 %v1246
        %1475 = vmatprep.subr.mxu0 %v1250
        %1476 = vmatpush1.msra.mxu0 %v1249
        %1477 = vmatprep.subr.mxu0 %v1253
        %1478 = vmatpush1.msra.mxu0 %v1252
        %1479 = vmatprep.subr.mxu0 %v1256
        %1480 = vmatpush1.msra.mxu0 %v1255
        %1481 = vmatprep.subr.mxu0 %v1259
        %1482 = vmatpush1.msra.mxu0 %v1258
        %1483 = vmatprep.subr.mxu0 %v1262
        %1484 = vmatpush1.msra.mxu0 %v1261
        %1485 = vmatprep.subr.mxu0 %v1265
        %1486 = vmatpush1.msra.mxu0 %v1264
        %1487 = vmatprep.subr.mxu0 %v1268
        %1488 = vmatpush1.msra.mxu0 %v1267
        %1489 = vmatprep.subr.mxu0 %v1271
        %1490 = vmatpush1.msra.mxu0 %v1270
        %1491 = vmatprep.mubr.f32.mxu0 %v1064
        %1492 = vmatmul.mubr.f32.gmra.mrb[0].mxu0 %v1063
        %v1493 = vpop.f32.mrb[0].mxu0
        %v1494 = vadd.f32 %v1405, %v1493
        %v1495 = vpop.f32.mrb[0].mxu0
        %v1496 = vadd.f32 %v1407, %v1495
        %1497 = vmatprep.mubr.f32.mxu0 %v1069
        %1498 = vmatmul.mubr.f32.gmra.mrb[0].mxu0 %v1068
        %v1499 = vpop.f32.mrb[0].mxu0
        %v1500 = vadd.f32 %v1411, %v1499
        %v1501 = vpop.f32.mrb[0].mxu0
        %v1502 = vadd.f32 %v1413, %v1501
        %1503 = vmatprep.mubr.f32.mxu0 %v1074
        %1504 = vmatmul.mubr.f32.gmra.mrb[0].mxu0 %v1073
        %v1505 = vpop.f32.mrb[0].mxu0
        %v1506 = vadd.f32 %v1417, %v1505
        %v1507 = vpop.f32.mrb[0].mxu0
        %v1508 = vadd.f32 %v1419, %v1507
        %1509 = vmatprep.mubr.f32.mxu0 %v1079
        %1510 = vmatmul.mubr.f32.gmra.mrb[0].mxu0 %v1078
        %v1511 = vpop.f32.mrb[0].mxu0
        %v1512 = vadd.f32 %v1423, %v1511
        %v1513 = vpop.f32.mrb[0].mxu0
        %v1514 = vadd.f32 %v1425, %v1513
        %1515 = vdwg.mxu0
        %1516 = vmatprep.subr.mxu0 %v1274
        %1517 = vmatpush1.msra.mxu0 %v1273
        %1518 = vmatprep.subr.mxu0 %v1277
        %1519 = vmatpush1.msra.mxu0 %v1276
        %1520 = vmatprep.subr.mxu0 %v1280
        %1521 = vmatpush1.msra.mxu0 %v1279
        %1522 = vmatprep.subr.mxu0 %v1283
        %1523 = vmatpush1.msra.mxu0 %v1282
        %1524 = vmatprep.subr.mxu0 %v1286
        %1525 = vmatpush1.msra.mxu0 %v1285
        %1526 = vmatprep.subr.mxu0 %v1289
        %1527 = vmatpush1.msra.mxu0 %v1288
        %1528 = vmatprep.subr.mxu0 %v1292
        %1529 = vmatpush1.msra.mxu0 %v1291
        %1530 = vmatprep.subr.mxu0 %v1295
        %1531 = vmatpush1.msra.mxu0 %v1294
        %1532 = vmatprep.subr.mxu0 %v1298
        %1533 = vmatpush1.msra.mxu0 %v1297
        %1534 = vmatprep.subr.mxu0 %v1301
        %1535 = vmatpush1.msra.mxu0 %v1300
        %1536 = vmatprep.subr.mxu0 %v1304
        %1537 = vmatpush1.msra.mxu0 %v1303
        %1538 = vmatprep.subr.mxu0 %v1307
        %1539 = vmatpush1.msra.mxu0 %v1306
        %1540 = vmatprep.subr.mxu0 %v1310
        %1541 = vmatpush1.msra.mxu0 %v1309
        %1542 = vmatprep.subr.mxu0 %v1313
        %1543 = vmatpush1.msra.mxu0 %v1312
        %1544 = vmatprep.subr.mxu0 %v1316
        %1545 = vmatpush1.msra.mxu0 %v1315
        %1546 = vmatprep.subr.mxu0 %v1319
        %1547 = vmatpush1.msra.mxu0 %v1318
        %1548 = vmatprep.subr.mxu0 0.0
        %1549 = vmatpush1.msra.mxu0 0.0
        %1550 = vmatprep.subr.mxu0 0.0
        %1551 = vmatpush1.msra.mxu0 0.0
        %1552 = vmatprep.subr.mxu0 0.0
        %1553 = vmatpush1.msra.mxu0 0.0
        %1554 = vmatprep.subr.mxu0 0.0
        %1555 = vmatpush1.msra.mxu0 0.0
        %1556 = vmatprep.subr.mxu0 0.0
        %1557 = vmatpush1.msra.mxu0 0.0
        %1558 = vmatprep.subr.mxu0 0.0
        %1559 = vmatpush1.msra.mxu0 0.0
        %1560 = vmatprep.subr.mxu0 0.0
        %1561 = vmatpush1.msra.mxu0 0.0
        %1562 = vmatprep.subr.mxu0 0.0
        %1563 = vmatpush1.msra.mxu0 0.0
        %1564 = vmatprep.subr.mxu0 0.0
        %1565 = vmatpush1.msra.mxu0 0.0
        %1566 = vmatprep.subr.mxu0 0.0
        %1567 = vmatpush1.msra.mxu0 0.0
        %1568 = vmatprep.subr.mxu0 0.0
        %1569 = vmatpush1.msra.mxu0 0.0
        %1570 = vmatprep.subr.mxu0 0.0
        %1571 = vmatpush1.msra.mxu0 0.0
        %1572 = vmatprep.subr.mxu0 0.0
        %1573 = vmatpush1.msra.mxu0 0.0
        %1574 = vmatprep.subr.mxu0 0.0
        %1575 = vmatpush1.msra.mxu0 0.0
        %1576 = vmatprep.subr.mxu0 0.0
        %1577 = vmatpush1.msra.mxu0 0.0
        %1578 = vmatprep.subr.mxu0 0.0
        %1579 = vmatpush1.msra.mxu0 0.0
        %1580 = vmatprep.mubr.f32.mxu0 0.0
        %1581 = vmatmul.mubr.f32.gmra.mrb[0].mxu0 %v1065
        %v1582 = vpop.f32.mrb[0].mxu0
        %v1583 = vadd.f32 %v1494, %v1582
        %v1584 = vpop.f32.mrb[0].mxu0
        %v1585 = vadd.f32 %v1496, %v1584
        %1586 = vmatprep.mubr.f32.mxu0 0.0
        %1587 = vmatmul.mubr.f32.gmra.mrb[0].mxu0 %v1070
        %v1588 = vpop.f32.mrb[0].mxu0
        %v1589 = vadd.f32 %v1500, %v1588
        %v1590 = vpop.f32.mrb[0].mxu0
        %v1591 = vadd.f32 %v1502, %v1590
        %1592 = vmatprep.mubr.f32.mxu0 0.0
        %1593 = vmatmul.mubr.f32.gmra.mrb[0].mxu0 %v1075
        %v1594 = vpop.f32.mrb[0].mxu0
        %v1595 = vadd.f32 %v1506, %v1594
        %v1596 = vpop.f32.mrb[0].mxu0
        %v1597 = vadd.f32 %v1508, %v1596
        %1598 = vmatprep.mubr.f32.mxu0 0.0
        %1599 = vmatmul.mubr.f32.gmra.mrb[0].mxu0 %v1080
        %v1600 = vpop.f32.mrb[0].mxu0
        %v1601 = vadd.f32 %v1512, %v1600
        %v1602 = vpop.f32.mrb[0].mxu0
        %v1603 = vadd.f32 %v1514, %v1602
        %1604 = vdwg.mxu0
        %1605 = vmatprep.subr.mxu0 0.0
        %1606 = vmatpush1.msra.mxu0 %v1083
        %1607 = vmatprep.subr.mxu0 0.0
        %1608 = vmatpush1.msra.mxu0 %v1086
        %1609 = vmatprep.subr.mxu0 0.0
        %1610 = vmatpush1.msra.mxu0 %v1089
        %1611 = vmatprep.subr.mxu0 0.0
        %1612 = vmatpush1.msra.mxu0 %v1092
        %1613 = vmatprep.subr.mxu0 0.0
        %1614 = vmatpush1.msra.mxu0 %v1095
        %1615 = vmatprep.subr.mxu0 0.0
        %1616 = vmatpush1.msra.mxu0 %v1098
        %1617 = vmatprep.subr.mxu0 0.0
        %1618 = vmatpush1.msra.mxu0 %v1101
        %1619 = vmatprep.subr.mxu0 0.0
        %1620 = vmatpush1.msra.mxu0 %v1104
        %1621 = vmatprep.subr.mxu0 0.0
        %1622 = vmatpush1.msra.mxu0 %v1107
        %1623 = vmatprep.subr.mxu0 0.0
        %1624 = vmatpush1.msra.mxu0 %v1110
        %1625 = vmatprep.subr.mxu0 0.0
        %1626 = vmatpush1.msra.mxu0 %v1113
        %1627 = vmatprep.subr.mxu0 0.0
        %1628 = vmatpush1.msra.mxu0 %v1116
        %1629 = vmatprep.subr.mxu0 0.0
        %1630 = vmatpush1.msra.mxu0 %v1119
        %1631 = vmatprep.subr.mxu0 0.0
        %1632 = vmatpush1.msra.mxu0 %v1122
        %1633 = vmatprep.subr.mxu0 0.0
        %1634 = vmatpush1.msra.mxu0 %v1125
        %1635 = vmatprep.subr.mxu0 0.0
        %1636 = vmatpush1.msra.mxu0 %v1128
        %1637 = vmatprep.subr.mxu0 0.0
        %1638 = vmatpush1.msra.mxu0 %v1131
        %1639 = vmatprep.subr.mxu0 0.0
        %1640 = vmatpush1.msra.mxu0 %v1134
        %1641 = vmatprep.subr.mxu0 0.0
        %1642 = vmatpush1.msra.mxu0 %v1137
        %1643 = vmatprep.subr.mxu0 0.0
        %1644 = vmatpush1.msra.mxu0 %v1140
        %1645 = vmatprep.subr.mxu0 0.0
        %1646 = vmatpush1.msra.mxu0 %v1143
        %1647 = vmatprep.subr.mxu0 0.0
        %1648 = vmatpush1.msra.mxu0 %v1146
        %1649 = vmatprep.subr.mxu0 0.0
        %1650 = vmatpush1.msra.mxu0 %v1149
        %1651 = vmatprep.subr.mxu0 0.0
        %1652 = vmatpush1.msra.mxu0 %v1152
        %1653 = vmatprep.subr.mxu0 0.0
        %1654 = vmatpush1.msra.mxu0 %v1155
        %1655 = vmatprep.subr.mxu0 0.0
        %1656 = vmatpush1.msra.mxu0 %v1158
        %1657 = vmatprep.subr.mxu0 0.0
        %1658 = vmatpush1.msra.mxu0 %v1161
        %1659 = vmatprep.subr.mxu0 0.0
        %1660 = vmatpush1.msra.mxu0 %v1164
        %1661 = vmatprep.subr.mxu0 0.0
        %1662 = vmatpush1.msra.mxu0 %v1167
        %1663 = vmatprep.subr.mxu0 0.0
        %1664 = vmatpush1.msra.mxu0 %v1170
        %1665 = vmatprep.subr.mxu0 0.0
        %1666 = vmatpush1.msra.mxu0 %v1173
        %1667 = vmatprep.subr.mxu0 0.0
        %1668 = vmatpush1.msra.mxu0 %v1176
        %1669 = vmatprep.mubr.f32.mxu0 %v1062
        %1670 = vmatmul.mubr.f32.gmra.mrb[0].mxu0 %v1061
        %v1671 = vpop.f32.mrb[0].mxu0
        %v1672 = vadd.f32 %v1334, %v1671
        %v1673 = vpop.f32.mrb[0].mxu0
        %1674 = vmatprep.mubr.f32.mxu0 %v1067
        %1675 = vmatmul.mubr.f32.gmra.mrb[0].mxu0 %v1066
        %v1676 = vpop.f32.mrb[0].mxu0
        %v1677 = vadd.f32 %v1334, %v1676
        %v1678 = vpop.f32.mrb[0].mxu0
        %1679 = vmatprep.mubr.f32.mxu0 %v1072
        %1680 = vmatmul.mubr.f32.gmra.mrb[0].mxu0 %v1071
        %v1681 = vpop.f32.mrb[0].mxu0
        %v1682 = vadd.f32 %v1334, %v1681
        %v1683 = vpop.f32.mrb[0].mxu0
        %1684 = vmatprep.mubr.f32.mxu0 %v1077
        %1685 = vmatmul.mubr.f32.gmra.mrb[0].mxu0 %v1076
        %v1686 = vpop.f32.mrb[0].mxu0
        %v1687 = vadd.f32 %v1334, %v1686
        %v1688 = vpop.f32.mrb[0].mxu0
        %1689 = vdwg.mxu0
        %1690 = vmatprep.subr.mxu0 0.0
        %1691 = vmatpush1.msra.mxu0 %v1179
        %1692 = vmatprep.subr.mxu0 0.0
        %1693 = vmatpush1.msra.mxu0 %v1182
        %1694 = vmatprep.subr.mxu0 0.0
        %1695 = vmatpush1.msra.mxu0 %v1185
        %1696 = vmatprep.subr.mxu0 0.0
        %1697 = vmatpush1.msra.mxu0 %v1188
        %1698 = vmatprep.subr.mxu0 0.0
        %1699 = vmatpush1.msra.mxu0 %v1191
        %1700 = vmatprep.subr.mxu0 0.0
        %1701 = vmatpush1.msra.mxu0 %v1194
        %1702 = vmatprep.subr.mxu0 0.0
        %1703 = vmatpush1.msra.mxu0 %v1197
        %1704 = vmatprep.subr.mxu0 0.0
        %1705 = vmatpush1.msra.mxu0 %v1200
        %1706 = vmatprep.subr.mxu0 0.0
        %1707 = vmatpush1.msra.mxu0 %v1203
        %1708 = vmatprep.subr.mxu0 0.0
        %1709 = vmatpush1.msra.mxu0 %v1206
        %1710 = vmatprep.subr.mxu0 0.0
        %1711 = vmatpush1.msra.mxu0 %v1209
        %1712 = vmatprep.subr.mxu0 0.0
        %1713 = vmatpush1.msra.mxu0 %v1212
        %1714 = vmatprep.subr.mxu0 0.0
        %1715 = vmatpush1.msra.mxu0 %v1215
        %1716 = vmatprep.subr.mxu0 0.0
        %1717 = vmatpush1.msra.mxu0 %v1218
        %1718 = vmatprep.subr.mxu0 0.0
        %1719 = vmatpush1.msra.mxu0 %v1221
        %1720 = vmatprep.subr.mxu0 0.0
        %1721 = vmatpush1.msra.mxu0 %v1224
        %1722 = vmatprep.subr.mxu0 0.0
        %1723 = vmatpush1.msra.mxu0 %v1227
        %1724 = vmatprep.subr.mxu0 0.0
        %1725 = vmatpush1.msra.mxu0 %v1230
        %1726 = vmatprep.subr.mxu0 0.0
        %1727 = vmatpush1.msra.mxu0 %v1233
        %1728 = vmatprep.subr.mxu0 0.0
        %1729 = vmatpush1.msra.mxu0 %v1236
        %1730 = vmatprep.subr.mxu0 0.0
        %1731 = vmatpush1.msra.mxu0 %v1239
        %1732 = vmatprep.subr.mxu0 0.0
        %1733 = vmatpush1.msra.mxu0 %v1242
        %1734 = vmatprep.subr.mxu0 0.0
        %1735 = vmatpush1.msra.mxu0 %v1245
        %1736 = vmatprep.subr.mxu0 0.0
        %1737 = vmatpush1.msra.mxu0 %v1248
        %1738 = vmatprep.subr.mxu0 0.0
        %1739 = vmatpush1.msra.mxu0 %v1251
        %1740 = vmatprep.subr.mxu0 0.0
        %1741 = vmatpush1.msra.mxu0 %v1254
        %1742 = vmatprep.subr.mxu0 0.0
        %1743 = vmatpush1.msra.mxu0 %v1257
        %1744 = vmatprep.subr.mxu0 0.0
        %1745 = vmatpush1.msra.mxu0 %v1260
        %1746 = vmatprep.subr.mxu0 0.0
        %1747 = vmatpush1.msra.mxu0 %v1263
        %1748 = vmatprep.subr.mxu0 0.0
        %1749 = vmatpush1.msra.mxu0 %v1266
        %1750 = vmatprep.subr.mxu0 0.0
        %1751 = vmatpush1.msra.mxu0 %v1269
        %1752 = vmatprep.subr.mxu0 0.0
        %1753 = vmatpush1.msra.mxu0 %v1272
        %1754 = vmatprep.mubr.f32.mxu0 %v1064
        %1755 = vmatmul.mubr.f32.gmra.mrb[0].mxu0 %v1063
        %v1756 = vpop.f32.mrb[0].mxu0
        %v1757 = vadd.f32 %v1672, %v1756
        %v1758 = vpop.f32.mrb[0].mxu0
        %1759 = vmatprep.mubr.f32.mxu0 %v1069
        %1760 = vmatmul.mubr.f32.gmra.mrb[0].mxu0 %v1068
        %v1761 = vpop.f32.mrb[0].mxu0
        %v1762 = vadd.f32 %v1677, %v1761
        %v1763 = vpop.f32.mrb[0].mxu0
        %1764 = vmatprep.mubr.f32.mxu0 %v1074
        %1765 = vmatmul.mubr.f32.gmra.mrb[0].mxu0 %v1073
        %v1766 = vpop.f32.mrb[0].mxu0
        %v1767 = vadd.f32 %v1682, %v1766
        %v1768 = vpop.f32.mrb[0].mxu0
        %1769 = vmatprep.mubr.f32.mxu0 %v1079
        %1770 = vmatmul.mubr.f32.gmra.mrb[0].mxu0 %v1078
        %v1771 = vpop.f32.mrb[0].mxu0
        %v1772 = vadd.f32 %v1687, %v1771
        %v1773 = vpop.f32.mrb[0].mxu0
        %1774 = vdwg.mxu0
        %1775 = vmatprep.subr.mxu0 0.0
        %1776 = vmatpush1.msra.mxu0 %v1275
        %1777 = vmatprep.subr.mxu0 0.0
        %1778 = vmatpush1.msra.mxu0 %v1278
        %1779 = vmatprep.subr.mxu0 0.0
        %1780 = vmatpush1.msra.mxu0 %v1281
        %1781 = vmatprep.subr.mxu0 0.0
        %1782 = vmatpush1.msra.mxu0 %v1284
        %1783 = vmatprep.subr.mxu0 0.0
        %1784 = vmatpush1.msra.mxu0 %v1287
        %1785 = vmatprep.subr.mxu0 0.0
        %1786 = vmatpush1.msra.mxu0 %v1290
        %1787 = vmatprep.subr.mxu0 0.0
        %1788 = vmatpush1.msra.mxu0 %v1293
        %1789 = vmatprep.subr.mxu0 0.0
        %1790 = vmatpush1.msra.mxu0 %v1296
        %1791 = vmatprep.subr.mxu0 0.0
        %1792 = vmatpush1.msra.mxu0 %v1299
        %1793 = vmatprep.subr.mxu0 0.0
        %1794 = vmatpush1.msra.mxu0 %v1302
        %1795 = vmatprep.subr.mxu0 0.0
        %1796 = vmatpush1.msra.mxu0 %v1305
        %1797 = vmatprep.subr.mxu0 0.0
        %1798 = vmatpush1.msra.mxu0 %v1308
        %1799 = vmatprep.subr.mxu0 0.0
        %1800 = vmatpush1.msra.mxu0 %v1311
        %1801 = vmatprep.subr.mxu0 0.0
        %1802 = vmatpush1.msra.mxu0 %v1314
        %1803 = vmatprep.subr.mxu0 0.0
        %1804 = vmatpush1.msra.mxu0 %v1317
        %1805 = vmatprep.subr.mxu0 0.0
        %1806 = vmatpush1.msra.mxu0 %v1320
        %1807 = vmatprep.subr.mxu0 0.0
        %1808 = vmatpush1.msra.mxu0 0.0
        %1809 = vmatprep.subr.mxu0 0.0
        %1810 = vmatpush1.msra.mxu0 0.0
        %1811 = vmatprep.subr.mxu0 0.0
        %1812 = vmatpush1.msra.mxu0 0.0
        %1813 = vmatprep.subr.mxu0 0.0
        %1814 = vmatpush1.msra.mxu0 0.0
        %1815 = vmatprep.subr.mxu0 0.0
        %1816 = vmatpush1.msra.mxu0 0.0
        %1817 = vmatprep.subr.mxu0 0.0
        %1818 = vmatpush1.msra.mxu0 0.0
        %1819 = vmatprep.subr.mxu0 0.0
        %1820 = vmatpush1.msra.mxu0 0.0
        %1821 = vmatprep.subr.mxu0 0.0
        %1822 = vmatpush1.msra.mxu0 0.0
        %1823 = vmatprep.subr.mxu0 0.0
        %1824 = vmatpush1.msra.mxu0 0.0
        %1825 = vmatprep.subr.mxu0 0.0
        %1826 = vmatpush1.msra.mxu0 0.0
        %1827 = vmatprep.subr.mxu0 0.0
        %1828 = vmatpush1.msra.mxu0 0.0
        %1829 = vmatprep.subr.mxu0 0.0
        %1830 = vmatpush1.msra.mxu0 0.0
        %1831 = vmatprep.subr.mxu0 0.0
        %1832 = vmatpush1.msra.mxu0 0.0
        %1833 = vmatprep.subr.mxu0 0.0
        %1834 = vmatpush1.msra.mxu0 0.0
        %1835 = vmatprep.subr.mxu0 0.0
        %1836 = vmatpush1.msra.mxu0 0.0
        %1837 = vmatprep.subr.mxu0 0.0
        %1838 = vmatpush1.msra.mxu0 0.0
        %1839 = vmatprep.mubr.f32.mxu0 0.0
        %1840 = vmatmul.mubr.f32.gmra.mrb[0].mxu0 %v1065
        %v1841 = vpop.f32.mrb[0].mxu0
        %v1842 = vadd.f32 %v1757, %v1841
        %v1843 = vpop.f32.mrb[0].mxu0
        %1844 = vmatprep.mubr.f32.mxu0 0.0
        %1845 = vmatmul.mubr.f32.gmra.mrb[0].mxu0 %v1070
        %v1846 = vpop.f32.mrb[0].mxu0
        %v1847 = vadd.f32 %v1762, %v1846
        %v1848 = vpop.f32.mrb[0].mxu0
        %1849 = vmatprep.mubr.f32.mxu0 0.0
        %1850 = vmatmul.mubr.f32.gmra.mrb[0].mxu0 %v1075
        %v1851 = vpop.f32.mrb[0].mxu0
        %v1852 = vadd.f32 %v1767, %v1851
        %v1853 = vpop.f32.mrb[0].mxu0
        %1854 = vmatprep.mubr.f32.mxu0 0.0
        %1855 = vmatmul.mubr.f32.gmra.mrb[0].mxu0 %v1080
        %v1856 = vpop.f32.mrb[0].mxu0
        %v1857 = vadd.f32 %v1772, %v1856
        %v1858 = vpop.f32.mrb[0].mxu0
        %1859 = vdwg.mxu0
        %v1860 = vmax.f32 %v1583, 0.0
        %v1861 = vmax.f32 %v1585, 0.0
        %v1862 = vmax.f32 %v1842, 0.0
        %v1863 = vmax.f32 %v1589, 0.0
        %v1864 = vmax.f32 %v1591, 0.0
        %v1865 = vmax.f32 %v1847, 0.0
        %v1866 = vmax.f32 %v1595, 0.0
        %v1867 = vmax.f32 %v1597, 0.0
        %v1868 = vmax.f32 %v1852, 0.0
        %v1869 = vmax.f32 %v1601, 0.0
        %v1870 = vmax.f32 %v1603, 0.0
        %v1871 = vmax.f32 %v1857, 0.0
        %v1872 = vld [vmem:[%s5] sm:$0xff]
        %v1873 = vld [vmem:[%s5 + $0x8] sm:$0xff]
        %v1874 = vld [vmem:[%s5 + $0x10] sm:$0xff]
        %v1875 = vld [vmem:[%s5 + $0x18] sm:$0xff]
        %v1876 = vld [vmem:[%s5 + $0x20] sm:$0xff]
        %v1877 = vld [vmem:[%s5 + $0x28] sm:$0xff]
        %v1878 = vld [vmem:[%s5 + $0x30] sm:$0xff]
        %v1879 = vld [vmem:[%s5 + $0x38] sm:$0xff]
        %v1880 = vld [vmem:[%s5 + $0x40] sm:$0xff]
        %v1881 = vld [vmem:[%s5 + $0x48] sm:$0xff]
        %v1882 = vld [vmem:[%s5 + $0x50] sm:$0xff]
        %v1883 = vld [vmem:[%s5 + $0x58] sm:$0xff]
        %v1884 = vld [vmem:[%s5 + $0x60] sm:$0xff]
        %v1885 = vld [vmem:[%s5 + $0x68] sm:$0xff]
        %v1886 = vld [vmem:[%s5 + $0x70] sm:$0xff]
        %v1887 = vld [vmem:[%s5 + $0x78] sm:$0xff]
        %v1888 = vld [vmem:[%s5 + $0x80] sm:$0xff]
        %v1889 = vld [vmem:[%s5 + $0x88] sm:$0xff]
        %v1890 = vld [vmem:[%s5 + $0x90] sm:$0xff]
        %v1891 = vld [vmem:[%s5 + $0x98] sm:$0xff]
        %v1892 = vld [vmem:[%s5 + $0xa0] sm:$0xff]
        %v1893 = vld [vmem:[%s5 + $0xa8] sm:$0xff]
        %v1894 = vld [vmem:[%s5 + $0xb0] sm:$0xff]
        %v1895 = vld [vmem:[%s5 + $0xb8] sm:$0xff]
        %v1896 = vld [vmem:[%s5 + $0xc0] sm:$0xff]
        %v1897 = vld [vmem:[%s5 + $0xc8] sm:$0xff]
        %v1898 = vld [vmem:[%s5 + $0xd0] sm:$0xff]
        %v1899 = vld [vmem:[%s5 + $0xd8] sm:$0xff]
        %v1900 = vld [vmem:[%s5 + $0xe0] sm:$0xff]
        %v1901 = vld [vmem:[%s5 + $0xe8] sm:$0xff]
        %v1902 = vld [vmem:[%s5 + $0xf0] sm:$0xff]
        %v1903 = vld [vmem:[%s5 + $0xf8] sm:$0xff]
        %v1904 = vld [vmem:[%s5 + $0x100] sm:$0xff]
        %v1905 = vld [vmem:[%s5 + $0x108] sm:$0xff]
        %v1906 = vld [vmem:[%s5 + $0x110] sm:$0xff]
        %v1907 = vld [vmem:[%s5 + $0x118] sm:$0xff]
        %v1908 = vld [vmem:[%s5 + $0x120] sm:$0xff]
        %v1909 = vld [vmem:[%s5 + $0x128] sm:$0xff]
        %v1910 = vld [vmem:[%s5 + $0x130] sm:$0xff]
        %v1911 = vld [vmem:[%s5 + $0x138] sm:$0xff]
        %v1912 = vld [vmem:[%s5 + $0x140] sm:$0xff]
        %v1913 = vld [vmem:[%s5 + $0x148] sm:$0xff]
        %v1914 = vld [vmem:[%s5 + $0x150] sm:$0xff]
        %v1915 = vld [vmem:[%s5 + $0x158] sm:$0xff]
        %v1916 = vld [vmem:[%s5 + $0x160] sm:$0xff]
        %v1917 = vld [vmem:[%s5 + $0x168] sm:$0xff]
        %v1918 = vld [vmem:[%s5 + $0x170] sm:$0xff]
        %v1919 = vld [vmem:[%s5 + $0x178] sm:$0xff]
        %v1920 = vld [vmem:[%s5 + $0x180] sm:$0xff]
        %v1921 = vld [vmem:[%s5 + $0x188] sm:$0xff]
        %v1922 = vld [vmem:[%s5 + $0x190] sm:$0xff]
        %v1923 = vld [vmem:[%s5 + $0x198] sm:$0xff]
        %v1924 = vld [vmem:[%s5 + $0x1a0] sm:$0xff]
        %v1925 = vld [vmem:[%s5 + $0x1a8] sm:$0xff]
        %v1926 = vld [vmem:[%s5 + $0x1b0] sm:$0xff]
        %v1927 = vld [vmem:[%s5 + $0x1b8] sm:$0xff]
        %v1928 = vld [vmem:[%s5 + $0x1c0] sm:$0xff]
        %v1929 = vld [vmem:[%s5 + $0x1c8] sm:$0xff]
        %v1930 = vld [vmem:[%s5 + $0x1d0] sm:$0xff]
        %v1931 = vld [vmem:[%s5 + $0x1d8] sm:$0xff]
        %v1932 = vld [vmem:[%s5 + $0x1e0] sm:$0xff]
        %v1933 = vld [vmem:[%s5 + $0x1e8] sm:$0xff]
        %v1934 = vld [vmem:[%s5 + $0x1f0] sm:$0xff]
        %v1935 = vld [vmem:[%s5 + $0x1f8] sm:$0xff]
        %v1936 = vld [vmem:[%s5 + $0x200] sm:$0xff]
        %v1937 = vld [vmem:[%s5 + $0x208] sm:$0xff]
        %v1938 = vld [vmem:[%s5 + $0x210] sm:$0xff]
        %v1939 = vld [vmem:[%s5 + $0x218] sm:$0xff]
        %v1940 = vld [vmem:[%s5 + $0x220] sm:$0xff]
        %v1941 = vld [vmem:[%s5 + $0x228] sm:$0xff]
        %v1942 = vld [vmem:[%s5 + $0x230] sm:$0xff]
        %v1943 = vld [vmem:[%s5 + $0x238] sm:$0xff]
        %v1944 = vld [vmem:[%s5 + $0x240] sm:$0xff]
        %v1945 = vld [vmem:[%s5 + $0x248] sm:$0xff]
        %v1946 = vld [vmem:[%s5 + $0x250] sm:$0xff]
        %v1947 = vld [vmem:[%s5 + $0x258] sm:$0xff]
        %v1948 = vld [vmem:[%s5 + $0x260] sm:$0xff]
        %v1949 = vld [vmem:[%s5 + $0x268] sm:$0xff]
        %v1950 = vld [vmem:[%s5 + $0x270] sm:$0xff]
        %v1951 = vld [vmem:[%s5 + $0x278] sm:$0xff]
        %v1952 = vld [vmem:[%s6] sm:$0x3]
        %v1954 = vlaneseq
        %v1955 = vshrl.u32 %v1954, 7
        %v1956 = vsub.s32 0, %v1955
        %v1957 = vrot.slane %v1952, %v1956
        %v1958 = vlaneseq
        %v1959 = vshrl.u32 %v1958, 7
        %v1960 = vsub.s32 1, %v1959
        %v1961 = vrot.slane %v1952, %v1960
        %v1965 = vsel %vm522, %v1862, 0
        %v1968 = vsel %vm522, %v1865, 0
        %v1971 = vsel %vm522, %v1868, 0
        %v1974 = vsel %vm522, %v1871, 0
        %1976 = vmatprep.subr.mxu0 %v1873
        %1977 = vmatpush1.msra.mxu0 %v1872
        %1978 = vmatprep.subr.mxu0 %v1875
        %1979 = vmatpush1.msra.mxu0 %v1874
        %1980 = vmatprep.subr.mxu0 %v1877
        %1981 = vmatpush1.msra.mxu0 %v1876
        %1982 = vmatprep.subr.mxu0 %v1879
        %1983 = vmatpush1.msra.mxu0 %v1878
        %1984 = vmatprep.subr.mxu0 %v1881
        %1985 = vmatpush1.msra.mxu0 %v1880
        %1986 = vmatprep.subr.mxu0 %v1883
        %1987 = vmatpush1.msra.mxu0 %v1882
        %1988 = vmatprep.subr.mxu0 %v1885
        %1989 = vmatpush1.msra.mxu0 %v1884
        %1990 = vmatprep.subr.mxu0 %v1887
        %1991 = vmatpush1.msra.mxu0 %v1886
        %1992 = vmatprep.subr.mxu0 %v1889
        %1993 = vmatpush1.msra.mxu0 %v1888
        %1994 = vmatprep.subr.mxu0 %v1891
        %1995 = vmatpush1.msra.mxu0 %v1890
        %1996 = vmatprep.subr.mxu0 %v1893
        %1997 = vmatpush1.msra.mxu0 %v1892
        %1998 = vmatprep.subr.mxu0 %v1895
        %1999 = vmatpush1.msra.mxu0 %v1894
        %2000 = vmatprep.subr.mxu0 %v1897
        %2001 = vmatpush1.msra.mxu0 %v1896
        %2002 = vmatprep.subr.mxu0 %v1899
        %2003 = vmatpush1.msra.mxu0 %v1898
        %2004 = vmatprep.subr.mxu0 %v1901
        %2005 = vmatpush1.msra.mxu0 %v1900
        %2006 = vmatprep.subr.mxu0 %v1903
        %2007 = vmatpush1.msra.mxu0 %v1902
        %2008 = vmatprep.subr.mxu0 %v1905
        %2009 = vmatpush1.msra.mxu0 %v1904
        %2010 = vmatprep.subr.mxu0 %v1907
        %2011 = vmatpush1.msra.mxu0 %v1906
        %2012 = vmatprep.subr.mxu0 %v1909
        %2013 = vmatpush1.msra.mxu0 %v1908
        %2014 = vmatprep.subr.mxu0 %v1911
        %2015 = vmatpush1.msra.mxu0 %v1910
        %2016 = vmatprep.subr.mxu0 %v1913
        %2017 = vmatpush1.msra.mxu0 %v1912
        %2018 = vmatprep.subr.mxu0 %v1915
        %2019 = vmatpush1.msra.mxu0 %v1914
        %2020 = vmatprep.subr.mxu0 %v1917
        %2021 = vmatpush1.msra.mxu0 %v1916
        %2022 = vmatprep.subr.mxu0 %v1919
        %2023 = vmatpush1.msra.mxu0 %v1918
        %2024 = vmatprep.subr.mxu0 %v1921
        %2025 = vmatpush1.msra.mxu0 %v1920
        %2026 = vmatprep.subr.mxu0 %v1923
        %2027 = vmatpush1.msra.mxu0 %v1922
        %2028 = vmatprep.subr.mxu0 %v1925
        %2029 = vmatpush1.msra.mxu0 %v1924
        %2030 = vmatprep.subr.mxu0 %v1927
        %2031 = vmatpush1.msra.mxu0 %v1926
        %2032 = vmatprep.subr.mxu0 %v1929
        %2033 = vmatpush1.msra.mxu0 %v1928
        %2034 = vmatprep.subr.mxu0 %v1931
        %2035 = vmatpush1.msra.mxu0 %v1930
        %2036 = vmatprep.subr.mxu0 %v1933
        %2037 = vmatpush1.msra.mxu0 %v1932
        %2038 = vmatprep.subr.mxu0 %v1935
        %2039 = vmatpush1.msra.mxu0 %v1934
        %2040 = vmatprep.mubr.f32.mxu0 %v1861
        %2041 = vmatmul.mubr.f32.gmra.mrb[0].mxu0 %v1860
        %v2042 = vpop.f32.mrb[0].mxu0
        %v2043 = vadd.f32 %v1957, %v2042
        %v2044 = vpop.f32.mrb[0].mxu0
        %v2045 = vadd.f32 %v1961, %v2044
        %2046 = vmatprep.mubr.f32.mxu0 %v1864
        %2047 = vmatmul.mubr.f32.gmra.mrb[0].mxu0 %v1863
        %v2048 = vpop.f32.mrb[0].mxu0
        %v2049 = vadd.f32 %v1957, %v2048
        %v2050 = vpop.f32.mrb[0].mxu0
        %v2051 = vadd.f32 %v1961, %v2050
        %2052 = vmatprep.mubr.f32.mxu0 %v1867
        %2053 = vmatmul.mubr.f32.gmra.mrb[0].mxu0 %v1866
        %v2054 = vpop.f32.mrb[0].mxu0
        %v2055 = vadd.f32 %v1957, %v2054
        %v2056 = vpop.f32.mrb[0].mxu0
        %v2057 = vadd.f32 %v1961, %v2056
        %2058 = vmatprep.mubr.f32.mxu0 %v1870
        %2059 = vmatmul.mubr.f32.gmra.mrb[0].mxu0 %v1869
        %v2060 = vpop.f32.mrb[0].mxu0
        %v2061 = vadd.f32 %v1957, %v2060
        %v2062 = vpop.f32.mrb[0].mxu0
        %v2063 = vadd.f32 %v1961, %v2062
        %2064 = vdwg.mxu0
        %2065 = vmatprep.subr.mxu0 %v1937
        %2066 = vmatpush1.msra.mxu0 %v1936
        %2067 = vmatprep.subr.mxu0 %v1939
        %2068 = vmatpush1.msra.mxu0 %v1938
        %2069 = vmatprep.subr.mxu0 %v1941
        %2070 = vmatpush1.msra.mxu0 %v1940
        %2071 = vmatprep.subr.mxu0 %v1943
        %2072 = vmatpush1.msra.mxu0 %v1942
        %2073 = vmatprep.subr.mxu0 %v1945
        %2074 = vmatpush1.msra.mxu0 %v1944
        %2075 = vmatprep.subr.mxu0 %v1947
        %2076 = vmatpush1.msra.mxu0 %v1946
        %2077 = vmatprep.subr.mxu0 %v1949
        %2078 = vmatpush1.msra.mxu0 %v1948
        %2079 = vmatprep.subr.mxu0 %v1951
        %2080 = vmatpush1.msra.mxu0 %v1950
        %2081 = vmatprep.subr.mxu0 0.0
        %2082 = vmatpush1.msra.mxu0 0.0
        %2083 = vmatprep.subr.mxu0 0.0
        %2084 = vmatpush1.msra.mxu0 0.0
        %2085 = vmatprep.subr.mxu0 0.0
        %2086 = vmatpush1.msra.mxu0 0.0
        %2087 = vmatprep.subr.mxu0 0.0
        %2088 = vmatpush1.msra.mxu0 0.0
        %2089 = vmatprep.subr.mxu0 0.0
        %2090 = vmatpush1.msra.mxu0 0.0
        %2091 = vmatprep.subr.mxu0 0.0
        %2092 = vmatpush1.msra.mxu0 0.0
        %2093 = vmatprep.subr.mxu0 0.0
        %2094 = vmatpush1.msra.mxu0 0.0
        %2095 = vmatprep.subr.mxu0 0.0
        %2096 = vmatpush1.msra.mxu0 0.0
        %2097 = vmatprep.subr.mxu0 0.0
        %2098 = vmatpush1.msra.mxu0 0.0
        %2099 = vmatprep.subr.mxu0 0.0
        %2100 = vmatpush1.msra.mxu0 0.0
        %2101 = vmatprep.subr.mxu0 0.0
        %2102 = vmatpush1.msra.mxu0 0.0
        %2103 = vmatprep.subr.mxu0 0.0
        %2104 = vmatpush1.msra.mxu0 0.0
        %2105 = vmatprep.subr.mxu0 0.0
        %2106 = vmatpush1.msra.mxu0 0.0
        %2107 = vmatprep.subr.mxu0 0.0
        %2108 = vmatpush1.msra.mxu0 0.0
        %2109 = vmatprep.subr.mxu0 0.0
        %2110 = vmatpush1.msra.mxu0 0.0
        %2111 = vmatprep.subr.mxu0 0.0
        %2112 = vmatpush1.msra.mxu0 0.0
        %2113 = vmatprep.subr.mxu0 0.0
        %2114 = vmatpush1.msra.mxu0 0.0
        %2115 = vmatprep.subr.mxu0 0.0
        %2116 = vmatpush1.msra.mxu0 0.0
        %2117 = vmatprep.subr.mxu0 0.0
        %2118 = vmatpush1.msra.mxu0 0.0
        %2119 = vmatprep.subr.mxu0 0.0
        %2120 = vmatpush1.msra.mxu0 0.0
        %2121 = vmatprep.subr.mxu0 0.0
        %2122 = vmatpush1.msra.mxu0 0.0
        %2123 = vmatprep.subr.mxu0 0.0
        %2124 = vmatpush1.msra.mxu0 0.0
        %2125 = vmatprep.subr.mxu0 0.0
        %2126 = vmatpush1.msra.mxu0 0.0
        %2127 = vmatprep.subr.mxu0 0.0
        %2128 = vmatpush1.msra.mxu0 0.0
        %2129 = vmatprep.mubr.f32.mxu0 0.0
        %2130 = vmatmul.mubr.f32.gmra.mrb[0].mxu0 %v1965
        %v2131 = vpop.f32.mrb[0].mxu0
        %v2132 = vadd.f32 %v2043, %v2131
        %v2133 = vpop.f32.mrb[0].mxu0
        %v2134 = vadd.f32 %v2045, %v2133
        %2135 = vmatprep.mubr.f32.mxu0 0.0
        %2136 = vmatmul.mubr.f32.gmra.mrb[0].mxu0 %v1968
        %v2137 = vpop.f32.mrb[0].mxu0
        %v2138 = vadd.f32 %v2049, %v2137
        %v2139 = vpop.f32.mrb[0].mxu0
        %v2140 = vadd.f32 %v2051, %v2139
        %2141 = vmatprep.mubr.f32.mxu0 0.0
        %2142 = vmatmul.mubr.f32.gmra.mrb[0].mxu0 %v1971
        %v2143 = vpop.f32.mrb[0].mxu0
        %v2144 = vadd.f32 %v2055, %v2143
        %v2145 = vpop.f32.mrb[0].mxu0
        %v2146 = vadd.f32 %v2057, %v2145
        %2147 = vmatprep.mubr.f32.mxu0 0.0
        %2148 = vmatmul.mubr.f32.gmra.mrb[0].mxu0 %v1974
        %v2149 = vpop.f32.mrb[0].mxu0
        %v2150 = vadd.f32 %v2061, %v2149
        %v2151 = vpop.f32.mrb[0].mxu0
        %v2152 = vadd.f32 %v2063, %v2151
        %2153 = vdwg.mxu0
        %v2154 = vmax.f32 %v2132, 0.0
        %v2155 = vmax.f32 %v2134, 0.0
        %v2156 = vmax.f32 %v2138, 0.0
        %v2157 = vmax.f32 %v2140, 0.0
        %v2158 = vmax.f32 %v2144, 0.0
        %v2159 = vmax.f32 %v2146, 0.0
        %v2160 = vmax.f32 %v2150, 0.0
        %v2161 = vmax.f32 %v2152, 0.0
        %2162 = vst [vmem:[%s274] sm:$0xff] %v2154
        %vm2163 = vcmask 261120
        %2164 = vst.msk [vmem:[%s274 + $0x8] sm:$0xff] %vm2163, %v2155
        %2165 = vst [vmem:[%s274 + $0x10] sm:$0xff] %v2156
        %2166 = vst.msk [vmem:[%s274 + $0x18] sm:$0xff] %vm2163, %v2157
        %2167 = vst [vmem:[%s274 + $0x20] sm:$0xff] %v2158
        %2168 = vst.msk [vmem:[%s274 + $0x28] sm:$0xff] %vm2163, %v2159
        %2169 = vst [vmem:[%s274 + $0x30] sm:$0xff] %v2160
        %2170 = vst.msk [vmem:[%s274 + $0x38] sm:$0xff] %vm2163, %v2161
        %s2171 = sand.u32 %s181, 1
        %s2172 = scalar_lea.sflag [#allocation3], %s2171
        %s2173 = sand.u32 %s181, 1
        %s2174 = smul.addr %s2173, 64
        %s2175 = scalar_lea.vmem [#allocation2], %s2174
        // Predicated region
        $region49: #{tpu_custom_call.1} parent=47 // pred_check
          %p2176 = pneg %p191
        $region50: #{tpu_custom_call.1} parent=47 // pred_check_branch
          %2178 = sbr.rel (%p2176) target = $region52
        $region51: #{tpu_custom_call.1} parent=47 // pred_region
          %s2179 = smul.u32 4, %s21
          %s2181 = ssub.s32 1024, 1024
          %2182 = vsyncadd %s2172, %s2181
          %s2183 = smul.addr %s2179, 2
          %s2184 = smul.addr %s2183, 128
          %s2185 = scalar_lea.hbm %s7, %s2184
          %s2186 = sshll.u32 %s2175, 4
          %s2187 = int_to_ptr.vmem [resolvable:$true] %s2186
          %2192 = dma.vmem_to_hbm [thread:$0]  %s2187, 1024, %s2185, %s2172, 256, 256, 16
        $region52: #{tpu_custom_call.1} parent=47 // pred_fallthru
          _
      $region48: #{tpu_custom_call.1} parent=5 // pred_fallthru
        _
      %p2193 = scmp.le.s32.totalorder 2, %s16
      // Predicated region
      $region53: #{tpu_custom_call.1} parent=5 // pred_check
        %p2194 = pneg %p2193
      $region54: #{tpu_custom_call.1} parent=5 // pred_check_branch
        %2196 = sbr.rel (%p2194) target = $region56
      $region55: #{tpu_custom_call.1} parent=5 // pred_region
        %s2197 = ssub.s32 %s16, 2
        // Predicated region
        $region57: #{tpu_custom_call.1} parent=55 // pred_check
          %p2198 = pneg %p197
        $region58: #{tpu_custom_call.1} parent=55 // pred_check_branch
          %2200 = sbr.rel (%p2198) target = $region60
        $region59: #{tpu_custom_call.1} parent=55 // pred_region
          %s2201 = sand.u32 %s182, 1
          %s2202 = scalar_lea.sflag [#allocation3], %s2201
          %s2203 = sand.u32 %s182, 1
          %s2204 = smul.addr %s2203, 64
          %s2205 = scalar_lea.vmem [#allocation2], %s2204
          %2206 = dma.done %s2202, 1024
        $region60: #{tpu_custom_call.1} parent=55 // pred_fallthru
          _
      $region56: #{tpu_custom_call.1} parent=5 // pred_fallthru
        _
    $region6: #{tpu_custom_call.1} parent=1 // loop_footer
      %s20 = sadd.s32 1, %s16
    $region7: #{tpu_custom_call.1} parent=1 // loop_footer_branch
      %15 = sbr.rel target = $region3
    $region8: #{tpu_custom_call.1} parent=1 // loop_exit
      _
    %2207 = vsyncpa [#allocation3], 1
    %s2208 = scalar_lea.sflag [#allocation3], 1
    %2209 = vsyncpa %s2208, 1

</llo_original>
